<compile_context>
chip_gen: v7x
topology: tpu7x:2x2x1
jax: 0.10.0
libtpu: 0.0.40
codegen_flags: <defaults>
</compile_context>

<pallas_src>
import functools
import math

import jax
import jax.numpy as jnp
import numpy as np
from jax import lax
from jax.experimental import pallas as pl
from jax.experimental.pallas import tpu as pltpu


def _conv3x3_banded_dots(x, w_ref, img_rows):
    """3x3 / stride-1 / pad-1 conv over B images stacked as a (B*H, W*Cin) slab.

    The kx taps and the width zero-padding live in the banded weight
    (3*W*Cin, W*Cout); the ky taps are three f32-accumulating MXU dots against
    the center slab and two row-rotated copies.  The per-image top/bottom halo
    is a one-row jnp.where mask (rows that wrap across image boundaries are
    exactly the masked rows, since H divides B*H).  MXU operands are cast to
    the weight dtype (bf16 by default); accumulation stays f32.
    """
    bh, wc = x.shape
    row = lax.broadcasted_iota(jnp.int32, (bh, 1), 0)
    not_top = (row % img_rows) != 0                     # not first row of an image
    not_bot = (row % img_rows) != (img_rows - 1)        # not last row of an image
    zero = jnp.zeros((), x.dtype)

    # x_up[r] = x[r-1] (zero at each image's first row)   -> ky = 0 tap
    # x_dn[r] = x[r+1] (zero at each image's last row)    -> ky = 2 tap
    x_up = jnp.where(not_top, pltpu.roll(x, 1, 0), zero)
    x_dn = jnp.where(not_bot, pltpu.roll(x, bh - 1, 0), zero)

    mxu_dtype = w_ref.dtype
    acc = jnp.dot(x_up.astype(mxu_dtype), w_ref[0:wc, :],
                  preferred_element_type=jnp.float32)
    acc += jnp.dot(x.astype(mxu_dtype), w_ref[wc:2 * wc, :],
                   preferred_element_type=jnp.float32)
    acc += jnp.dot(x_dn.astype(mxu_dtype), w_ref[2 * wc:3 * wc, :],
                   preferred_element_type=jnp.float32)
    return acc


def _basicblock_kernel(x_ref, wa_ref, wb_ref, ba_ref, bb_ref, out_ref, *, img_rows):
    # x_ref   : (B*H, W*C)     f32 lane-dense slab, B images stacked in M
    # wa_ref  : (3*W*C, W*P)   banded conv_a weights, bn_a scale folded in
    # wb_ref  : (3*W*P, W*P)   banded conv_b weights, bn_b scale folded in
    # ba_ref  : (1, W*P)       bn_a bias tiled across W           (f32)
    # bb_ref  : (1, W*P)       bn_b bias tiled across W           (f32)
    # out_ref : (B*H, W*P)     f32
    x = x_ref[...].astype(jnp.float32)

    # conv_a (+ folded bn_a scale) -> bias -> ReLU            (f32 accumulate)
    ya = _conv3x3_banded_dots(x, wa_ref, img_rows)
    ya = jnp.maximum(ya + ba_ref[...].astype(jnp.float32), 0.0)

    # conv_b (+ folded bn_b scale) -> bias -> +identity residual -> ReLU
    yb = _conv3x3_banded_dots(ya, wb_ref, img_rows)
    out_ref[...] = jnp.maximum(x + yb + bb_ref[...].astype(jnp.float32),
                               0.0).astype(out_ref.dtype)


def _pick_block_images(n_images, img_rows, m_target=256):
    """Number of images stacked into the matmul M dim per grid step.

    Largest divisor b of n_images with b*img_rows <= m_target (fills the MXU M
    dimension, amortizes per-step pipeline overhead); prefers grids of length
    >= 2 once b*img_rows >= 128 so v7x's two TensorCores both get work.
    """
    divisors = [b for b in range(1, n_images + 1) if n_images % b == 0]
    fitting = [b for b in divisors if b * img_rows <= m_target] or [1]
    for b in sorted(fitting, reverse=True):
        if n_images // b >= 2 and b * img_rows >= 128:
            return b
    return max(fitting)


def resnet_basicblock(x_nchw, params, *, block_images=None):
    """Forward pass of ResNetBasicblock (stride=1, downsample=None).

    x_nchw: (N, C, H, W) float32 with C == planes (identity residual).
    """
    N, C, H, W = x_nchw.shape
    wa, wb = params["wa_band"], params["wb_band"]
    ba, bb = params["ba"], params["bb"]
    WP = wa.shape[-1]
    P = WP // W
    WC = W * C

    if C != P:
        raise NotImplementedError(
            "identity residual requires inplanes == planes "
            "(stride>1 / downsample projection path not implemented)")
    if WC % 128 or WP % 128:
        raise ValueError("W*C and W*planes must be multiples of 128 "
                         "(lane-dense, unmasked-store slabs)")
    if H % 8:
        raise ValueError("H must be a multiple of 8 (sublane-dense slabs)")
    if wa.shape != (3 * WC, WP) or wb.shape != (3 * WP, WP):
        raise ValueError("banded weight shapes do not match the input shape")

    B = _pick_block_images(N, H) if block_images is None else block_images
    if N % B:
        raise ValueError(f"block_images={B} must divide the batch size {N}")
    G, BH = N // B, B * H

    # NCHW -> lane-dense (N//B, B*H, W*C) slabs; layout plumbing done by XLA.
    x = jnp.transpose(x_nchw, (0, 2, 3, 1)).astype(jnp.float32)
    x = x.reshape(G, BH, WC)

    flops = 2 * 2 * N * H * (3 * WC) * WP                 # two banded matmuls
    bytes_accessed = (N * H * WC * 4 + N * H * WP * 4
                      + wa.size * wa.dtype.itemsize + wb.size * wb.dtype.itemsize
                      + ba.size * 4 + bb.size * 4)

    grid_spec = pltpu.PrefetchScalarGridSpec(
        num_scalar_prefetch=0,
        grid=(G,),
        in_specs=[
            pl.BlockSpec((None, BH, WC), lambda g: (g, 0, 0)),
            pl.BlockSpec((3 * WC, WP), lambda g: (0, 0)),     # resident weights
            pl.BlockSpec((3 * WP, WP), lambda g: (0, 0)),
            pl.BlockSpec((1, WP), lambda g: (0, 0)),
            pl.BlockSpec((1, WP), lambda g: (0, 0)),
        ],
        out_specs=pl.BlockSpec((None, BH, WP), lambda g: (g, 0, 0)),
    )
    out = pl.pallas_call(
        functools.partial(_basicblock_kernel, img_rows=H),
        out_shape=jax.ShapeDtypeStruct((G, BH, WP), jnp.float32),
        grid_spec=grid_spec,
        compiler_params=pltpu.CompilerParams(
            dimension_semantics=("parallel",)),
        cost_estimate=pl.CostEstimate(flops=flops, transcendentals=0,
                                      bytes_accessed=bytes_accessed),
    )(x, wa, wb, ba, bb)

    out = out.reshape(N, H, W, P)
    return jnp.transpose(out, (0, 3, 1, 2))                        # -> NCHW


def _conv3x3_band(w_oihw, scale, W, dtype):
    """Banded matrix for a 3x3 / stride-1 / pad-1 conv over a (H, W*Cin) slab.

    Returns (3*W*Cin, W*Cout): row index = ky*(W*Cin) + x_in*Cin + c,
    column index = x_out*Cout + p.  The kx taps and the width zero-padding are
    embedded in the band structure; `scale` (per-output-channel BN scale) is
    folded into the weights.
    """
    P, C, _, _ = w_oihw.shape
    w = np.transpose(np.asarray(w_oihw, np.float32), (2, 3, 1, 0))  # (ky,kx,C,P)
    w = w * np.asarray(scale, np.float32)                           # fold BN scale
    band = np.zeros((3, W * C, W * P), np.float32)
    for kx in range(3):
        for xo in range(W):
            xi = xo + kx - 1
            if 0 <= xi < W:
                band[:, xi * C:(xi + 1) * C, xo * P:(xo + 1) * P] = w[:, kx]
    return jnp.asarray(band.reshape(3 * W * C, W * P), dtype=dtype)


def init_raw_params(key, inplanes, planes, eps=1e-5):
    """Deterministic synthetic parameters (shapes match the PyTorch module)."""
    ks = jax.random.split(key, 10)
    wa_oihw = jax.random.normal(ks[0], (planes, inplanes, 3, 3), jnp.float32) \
        * (1.0 / math.sqrt(inplanes * 9))
    wb_oihw = jax.random.normal(ks[1], (planes, planes, 3, 3), jnp.float32) \
        * (1.0 / math.sqrt(planes * 9))

    def bn(kg, kb, km, kv):
        gamma = 1.0 + 0.1 * jax.random.normal(kg, (planes,), jnp.float32)
        beta = 0.1 * jax.random.normal(kb, (planes,), jnp.float32)
        mean = 0.1 * jax.random.normal(km, (planes,), jnp.float32)
        var = jnp.abs(jax.random.normal(kv, (planes,), jnp.float32)) + 0.5
        return gamma, beta, mean, var

    bn_a = bn(ks[2], ks[3], ks[4], ks[5])
    bn_b = bn(ks[6], ks[7], ks[8], ks[9])
    return (wa_oihw, wb_oihw, bn_a, bn_b, eps)


def prepare_params(raw, W, mxu_dtype=jnp.bfloat16):
    """Fold inference-mode BN into the convs and build the banded kernel params."""
    wa_oihw, wb_oihw, bn_a, bn_b, eps = raw

    def fold(bn_params):
        gamma, beta, mean, var = bn_params
        scale = gamma * lax.rsqrt(var + eps)
        bias = beta - mean * scale
        return scale, bias

    sa, ba = fold(bn_a)
    sb, bb = fold(bn_b)
    planes = wa_oihw.shape[0]
    return {
        "wa_band": _conv3x3_band(wa_oihw, sa, W, mxu_dtype),
        "wb_band": _conv3x3_band(wb_oihw, sb, W, mxu_dtype),
        "ba": jnp.tile(ba, W).reshape(1, W * planes).astype(jnp.float32),
        "bb": jnp.tile(bb, W).reshape(1, W * planes).astype(jnp.float32),
    }


def reference_nchw(x, wa_oihw, wb_oihw, bn_a, bn_b, eps):
    """Pure-JAX reference using un-folded inference-mode BatchNorm."""
    dn = ("NCHW", "OIHW", "NCHW")

    def batchnorm(y, bn_params):
        gamma, beta, mean, var = (p[None, :, None, None] for p in bn_params)
        return (y - mean) * gamma * lax.rsqrt(var + eps) + beta

    y = lax.conv_general_dilated(x, wa_oihw, (1, 1), ((1, 1), (1, 1)),
                                 dimension_numbers=dn)
    y = jnp.maximum(batchnorm(y, bn_a), 0.0)
    y = lax.conv_general_dilated(y, wb_oihw, (1, 1), ((1, 1), (1, 1)),
                                 dimension_numbers=dn)
    y = batchnorm(y, bn_b)
    return jnp.maximum(x + y, 0.0)


if __name__ == "__main__":
    key = jax.random.PRNGKey(0)
    kx_, kp = jax.random.split(key)

    # inplanes = planes = 8, H = W = 16  ->  W*C = 128 lane-dense slabs.
    # N = 16 so the auto picker stacks 8 images per grid step (MXU M = 128)
    # and keeps a 2-step grid so v7x's two TensorCores both get work.
    N, C, H, W = 16, 8, 16, 16
    planes = 8
    x = jax.random.normal(kx_, (N, C, H, W), jnp.float32)

    raw = init_raw_params(kp, C, planes)

    # bf16 MXU operands (native v6e/v7x MXU path), f32 accumulate + epilogue.
    params_bf16 = prepare_params(raw, W, mxu_dtype=jnp.bfloat16)
    out_bf16 = jax.block_until_ready(resnet_basicblock(x, params_bf16))

    # Full-f32 path: exact validation of the band/halo/BN-fold plumbing.
    params_f32 = prepare_params(raw, W, mxu_dtype=jnp.float32)
    out_f32 = jax.block_until_ready(resnet_basicblock(x, params_f32))

    ref = jax.block_until_ready(reference_nchw(x, *raw))

    assert out_bf16.shape == (N, planes, H, W)
    assert out_f32.shape == (N, planes, H, W)
    np.testing.assert_allclose(np.asarray(out_f32), np.asarray(ref),
                               rtol=2e-4, atol=2e-4)
    np.testing.assert_allclose(np.asarray(out_bf16), np.asarray(ref),
                               rtol=1e-1, atol=1e-1)
    print("KERNEL_OK")
</pallas_src>

<mosaic_0001>
module attributes {stable_mosaic.version = 11 : i64} {
  func.func @_basicblock_kernel(%arg0: i32, %arg1: memref<1x128x128xf32, #tpu.memory_space<vmem>>, %arg2: memref<384x128xbf16, #tpu.memory_space<vmem>>, %arg3: memref<384x128xbf16, #tpu.memory_space<vmem>>, %arg4: memref<1x128xf32, #tpu.memory_space<vmem>>, %arg5: memref<1x128xf32, #tpu.memory_space<vmem>>, %arg6: memref<1x128x128xf32, #tpu.memory_space<vmem>>) attributes {dimension_semantics = [#tpu.dimension_semantics<parallel>], iteration_bounds = array<i64: 2>, scalar_prefetch = 0 : i64, scratch_operands = 0 : i64, tpu.core_type = #tpu.core_type<tc>, window_params = [{transform_indices = @transform_0, window_bounds = array<i64: 1, 128, 128>}, {pipeline_mode = #tpu.pipeline_mode<synchronous>, transform_indices = @transform_1, window_bounds = array<i64: 384, 128>}, {pipeline_mode = #tpu.pipeline_mode<synchronous>, transform_indices = @transform_2, window_bounds = array<i64: 384, 128>}, {pipeline_mode = #tpu.pipeline_mode<synchronous>, transform_indices = @transform_3, window_bounds = array<i64: 1, 128>}, {pipeline_mode = #tpu.pipeline_mode<synchronous>, transform_indices = @transform_4, window_bounds = array<i64: 1, 128>}, {transform_indices = @transform_5, window_bounds = array<i64: 1, 128, 128>}]} {
    %c0 = arith.constant 0 : index
    %c0_0 = arith.constant 0 : index
    %c0_1 = arith.constant 0 : index
    %0 = vector.load %arg1[%c0, %c0_0, %c0_1] : memref<1x128x128xf32, #tpu.memory_space<vmem>>, vector<1x128x128xf32>
    %1 = vector.shape_cast %0 : vector<1x128x128xf32> to vector<128x128xf32>
    %2 = tpu.iota {dimensions = array<i32: 0>} : vector<128x1xi32>
    %c16_i32 = arith.constant 16 : i32
    %c0_i32 = arith.constant 0 : i32
    %3 = arith.cmpi eq, %c16_i32, %c0_i32 : i32
    %c1_i32 = arith.constant 1 : i32
    %4 = arith.select %3, %c1_i32, %c16_i32 : i32
    %5 = vector.broadcast %4 : i32 to vector<128x1xi32>
    %6 = arith.remsi %2, %5 : vector<128x1xi32>
    %c0_i32_2 = arith.constant 0 : i32
    %7 = vector.broadcast %c0_i32_2 : i32 to vector<128x1xi32>
    %8 = arith.cmpi ne, %6, %7 : vector<128x1xi32>
    %c0_i32_3 = arith.constant 0 : i32
    %9 = vector.broadcast %c0_i32_3 : i32 to vector<128x1xi32>
    %10 = arith.cmpi slt, %6, %9 : vector<128x1xi32>
    %c0_i32_4 = arith.constant 0 : i32
    %11 = arith.cmpi slt, %4, %c0_i32_4 : i32
    %12 = vector.broadcast %11 : i1 to vector<128x1xi1>
    %13 = vector.broadcast %12 : vector<128x1xi1> to vector<128x1xi1>
    %14 = arith.xori %10, %13 : vector<128x1xi1>
    %15 = arith.andi %14, %8 : vector<128x1xi1>
    %16 = vector.broadcast %4 : i32 to vector<128x1xi32>
    %17 = arith.addi %6, %16 : vector<128x1xi32>
    %18 = arith.select %15, %17, %6 : vector<128x1xi1>, vector<128x1xi32>
    %c0_i32_5 = arith.constant 0 : i32
    %19 = vector.broadcast %c0_i32_5 : i32 to vector<128x1xi32>
    %20 = arith.cmpi ne, %18, %19 : vector<128x1xi32>
    %c16_i32_6 = arith.constant 16 : i32
    %c0_i32_7 = arith.constant 0 : i32
    %21 = arith.cmpi eq, %c16_i32_6, %c0_i32_7 : i32
    %c1_i32_8 = arith.constant 1 : i32
    %22 = arith.select %21, %c1_i32_8, %c16_i32_6 : i32
    %23 = vector.broadcast %22 : i32 to vector<128x1xi32>
    %24 = arith.remsi %2, %23 : vector<128x1xi32>
    %c0_i32_9 = arith.constant 0 : i32
    %25 = vector.broadcast %c0_i32_9 : i32 to vector<128x1xi32>
    %26 = arith.cmpi ne, %24, %25 : vector<128x1xi32>
    %c0_i32_10 = arith.constant 0 : i32
    %27 = vector.broadcast %c0_i32_10 : i32 to vector<128x1xi32>
    %28 = arith.cmpi slt, %24, %27 : vector<128x1xi32>
    %c0_i32_11 = arith.constant 0 : i32
    %29 = arith.cmpi slt, %22, %c0_i32_11 : i32
    %30 = vector.broadcast %29 : i1 to vector<128x1xi1>
    %31 = vector.broadcast %30 : vector<128x1xi1> to vector<128x1xi1>
    %32 = arith.xori %28, %31 : vector<128x1xi1>
    %33 = arith.andi %32, %26 : vector<128x1xi1>
    %34 = vector.broadcast %22 : i32 to vector<128x1xi32>
    %35 = arith.addi %24, %34 : vector<128x1xi32>
    %36 = arith.select %33, %35, %24 : vector<128x1xi1>, vector<128x1xi32>
    %c15_i32 = arith.constant 15 : i32
    %37 = vector.broadcast %c15_i32 : i32 to vector<128x1xi32>
    %38 = arith.cmpi ne, %36, %37 : vector<128x1xi32>
    %c1_i32_12 = arith.constant 1 : i32
    %39 = tpu.dynamic_rotate %1 by %c1_i32_12 dim 0 : vector<128x128xf32>, i32 -> vector<128x128xf32>
    %cst = arith.constant 0.000000e+00 : f32
    %40 = vector.shape_cast %20 : vector<128x1xi1> to vector<128x1xi1>
    %41 = vector.broadcast %40 : vector<128x1xi1> to vector<128x128xi1>
    %42 = vector.broadcast %cst : f32 to vector<128x128xf32>
    %43 = arith.select %41, %39, %42 : vector<128x128xi1>, vector<128x128xf32>
    %c127_i32 = arith.constant 127 : i32
    %44 = tpu.dynamic_rotate %1 by %c127_i32 dim 0 : vector<128x128xf32>, i32 -> vector<128x128xf32>
    %cst_13 = arith.constant 0.000000e+00 : f32
    %45 = vector.shape_cast %38 : vector<128x1xi1> to vector<128x1xi1>
    %46 = vector.broadcast %45 : vector<128x1xi1> to vector<128x128xi1>
    %47 = vector.broadcast %cst_13 : f32 to vector<128x128xf32>
    %48 = arith.select %46, %44, %47 : vector<128x128xi1>, vector<128x128xf32>
    %49 = arith.truncf %43 : vector<128x128xf32> to vector<128x128xbf16>
    %c0_14 = arith.constant 0 : index
    %c0_15 = arith.constant 0 : index
    %50 = vector.load %arg2[%c0_14, %c0_15] : memref<384x128xbf16, #tpu.memory_space<vmem>>, vector<128x128xbf16>
    %cst_16 = arith.constant dense<0.000000e+00> : vector<128x128xf32>
    %51 = tpu.matmul %49, %50, %cst_16 {dimension_numbers = #tpu.dot_dimension_numbers<[1], [0], [0], [1], [0, 0, 1, 1], [], []>} : vector<128x128xbf16>, vector<128x128xbf16>, vector<128x128xf32> -> vector<128x128xf32>
    %52 = arith.truncf %1 : vector<128x128xf32> to vector<128x128xbf16>
    %c128 = arith.constant 128 : index
    %c0_17 = arith.constant 0 : index
    %53 = vector.load %arg2[%c128, %c0_17] : memref<384x128xbf16, #tpu.memory_space<vmem>>, vector<128x128xbf16>
    %cst_18 = arith.constant dense<0.000000e+00> : vector<128x128xf32>
    %54 = tpu.matmul %52, %53, %cst_18 {dimension_numbers = #tpu.dot_dimension_numbers<[1], [0], [0], [1], [0, 0, 1, 1], [], []>} : vector<128x128xbf16>, vector<128x128xbf16>, vector<128x128xf32> -> vector<128x128xf32>
    %55 = arith.addf %51, %54 : vector<128x128xf32>
    %56 = arith.truncf %48 : vector<128x128xf32> to vector<128x128xbf16>
    %c256 = arith.constant 256 : index
    %c0_19 = arith.constant 0 : index
    %57 = vector.load %arg2[%c256, %c0_19] : memref<384x128xbf16, #tpu.memory_space<vmem>>, vector<128x128xbf16>
    %cst_20 = arith.constant dense<0.000000e+00> : vector<128x128xf32>
    %58 = tpu.matmul %56, %57, %cst_20 {dimension_numbers = #tpu.dot_dimension_numbers<[1], [0], [0], [1], [0, 0, 1, 1], [], []>} : vector<128x128xbf16>, vector<128x128xbf16>, vector<128x128xf32> -> vector<128x128xf32>
    %59 = arith.addf %55, %58 : vector<128x128xf32>
    %c0_21 = arith.constant 0 : index
    %c0_22 = arith.constant 0 : index
    %60 = vector.load %arg4[%c0_21, %c0_22] : memref<1x128xf32, #tpu.memory_space<vmem>>, vector<1x128xf32>
    %61 = vector.broadcast %60 : vector<1x128xf32> to vector<128x128xf32>
    %62 = arith.addf %59, %61 : vector<128x128xf32>
    %cst_23 = arith.constant 0.000000e+00 : f32
    %63 = vector.broadcast %cst_23 : f32 to vector<128x128xf32>
    %64 = arith.maximumf %62, %63 : vector<128x128xf32>
    %65 = tpu.iota {dimensions = array<i32: 0>} : vector<128x1xi32>
    %c16_i32_24 = arith.constant 16 : i32
    %c0_i32_25 = arith.constant 0 : i32
    %66 = arith.cmpi eq, %c16_i32_24, %c0_i32_25 : i32
    %c1_i32_26 = arith.constant 1 : i32
    %67 = arith.select %66, %c1_i32_26, %c16_i32_24 : i32
    %68 = vector.broadcast %67 : i32 to vector<128x1xi32>
    %69 = arith.remsi %65, %68 : vector<128x1xi32>
    %c0_i32_27 = arith.constant 0 : i32
    %70 = vector.broadcast %c0_i32_27 : i32 to vector<128x1xi32>
    %71 = arith.cmpi ne, %69, %70 : vector<128x1xi32>
    %c0_i32_28 = arith.constant 0 : i32
    %72 = vector.broadcast %c0_i32_28 : i32 to vector<128x1xi32>
    %73 = arith.cmpi slt, %69, %72 : vector<128x1xi32>
    %c0_i32_29 = arith.constant 0 : i32
    %74 = arith.cmpi slt, %67, %c0_i32_29 : i32
    %75 = vector.broadcast %74 : i1 to vector<128x1xi1>
    %76 = vector.broadcast %75 : vector<128x1xi1> to vector<128x1xi1>
    %77 = arith.xori %73, %76 : vector<128x1xi1>
    %78 = arith.andi %77, %71 : vector<128x1xi1>
    %79 = vector.broadcast %67 : i32 to vector<128x1xi32>
    %80 = arith.addi %69, %79 : vector<128x1xi32>
    %81 = arith.select %78, %80, %69 : vector<128x1xi1>, vector<128x1xi32>
    %c0_i32_30 = arith.constant 0 : i32
    %82 = vector.broadcast %c0_i32_30 : i32 to vector<128x1xi32>
    %83 = arith.cmpi ne, %81, %82 : vector<128x1xi32>
    %c16_i32_31 = arith.constant 16 : i32
    %c0_i32_32 = arith.constant 0 : i32
    %84 = arith.cmpi eq, %c16_i32_31, %c0_i32_32 : i32
    %c1_i32_33 = arith.constant 1 : i32
    %85 = arith.select %84, %c1_i32_33, %c16_i32_31 : i32
    %86 = vector.broadcast %85 : i32 to vector<128x1xi32>
    %87 = arith.remsi %65, %86 : vector<128x1xi32>
    %c0_i32_34 = arith.constant 0 : i32
    %88 = vector.broadcast %c0_i32_34 : i32 to vector<128x1xi32>
    %89 = arith.cmpi ne, %87, %88 : vector<128x1xi32>
    %c0_i32_35 = arith.constant 0 : i32
    %90 = vector.broadcast %c0_i32_35 : i32 to vector<128x1xi32>
    %91 = arith.cmpi slt, %87, %90 : vector<128x1xi32>
    %c0_i32_36 = arith.constant 0 : i32
    %92 = arith.cmpi slt, %85, %c0_i32_36 : i32
    %93 = vector.broadcast %92 : i1 to vector<128x1xi1>
    %94 = vector.broadcast %93 : vector<128x1xi1> to vector<128x1xi1>
    %95 = arith.xori %91, %94 : vector<128x1xi1>
    %96 = arith.andi %95, %89 : vector<128x1xi1>
    %97 = vector.broadcast %85 : i32 to vector<128x1xi32>
    %98 = arith.addi %87, %97 : vector<128x1xi32>
    %99 = arith.select %96, %98, %87 : vector<128x1xi1>, vector<128x1xi32>
    %c15_i32_37 = arith.constant 15 : i32
    %100 = vector.broadcast %c15_i32_37 : i32 to vector<128x1xi32>
    %101 = arith.cmpi ne, %99, %100 : vector<128x1xi32>
    %c1_i32_38 = arith.constant 1 : i32
    %102 = tpu.dynamic_rotate %64 by %c1_i32_38 dim 0 : vector<128x128xf32>, i32 -> vector<128x128xf32>
    %cst_39 = arith.constant 0.000000e+00 : f32
    %103 = vector.shape_cast %83 : vector<128x1xi1> to vector<128x1xi1>
    %104 = vector.broadcast %103 : vector<128x1xi1> to vector<128x128xi1>
    %105 = vector.broadcast %cst_39 : f32 to vector<128x128xf32>
    %106 = arith.select %104, %102, %105 : vector<128x128xi1>, vector<128x128xf32>
    %c127_i32_40 = arith.constant 127 : i32
    %107 = tpu.dynamic_rotate %64 by %c127_i32_40 dim 0 : vector<128x128xf32>, i32 -> vector<128x128xf32>
    %cst_41 = arith.constant 0.000000e+00 : f32
    %108 = vector.shape_cast %101 : vector<128x1xi1> to vector<128x1xi1>
    %109 = vector.broadcast %108 : vector<128x1xi1> to vector<128x128xi1>
    %110 = vector.broadcast %cst_41 : f32 to vector<128x128xf32>
    %111 = arith.select %109, %107, %110 : vector<128x128xi1>, vector<128x128xf32>
    %112 = arith.truncf %106 : vector<128x128xf32> to vector<128x128xbf16>
    %c0_42 = arith.constant 0 : index
    %c0_43 = arith.constant 0 : index
    %113 = vector.load %arg3[%c0_42, %c0_43] : memref<384x128xbf16, #tpu.memory_space<vmem>>, vector<128x128xbf16>
    %cst_44 = arith.constant dense<0.000000e+00> : vector<128x128xf32>
    %114 = tpu.matmul %112, %113, %cst_44 {dimension_numbers = #tpu.dot_dimension_numbers<[1], [0], [0], [1], [0, 0, 1, 1], [], []>} : vector<128x128xbf16>, vector<128x128xbf16>, vector<128x128xf32> -> vector<128x128xf32>
    %115 = arith.truncf %64 : vector<128x128xf32> to vector<128x128xbf16>
    %c128_45 = arith.constant 128 : index
    %c0_46 = arith.constant 0 : index
    %116 = vector.load %arg3[%c128_45, %c0_46] : memref<384x128xbf16, #tpu.memory_space<vmem>>, vector<128x128xbf16>
    %cst_47 = arith.constant dense<0.000000e+00> : vector<128x128xf32>
    %117 = tpu.matmul %115, %116, %cst_47 {dimension_numbers = #tpu.dot_dimension_numbers<[1], [0], [0], [1], [0, 0, 1, 1], [], []>} : vector<128x128xbf16>, vector<128x128xbf16>, vector<128x128xf32> -> vector<128x128xf32>
    %118 = arith.addf %114, %117 : vector<128x128xf32>
    %119 = arith.truncf %111 : vector<128x128xf32> to vector<128x128xbf16>
    %c256_48 = arith.constant 256 : index
    %c0_49 = arith.constant 0 : index
    %120 = vector.load %arg3[%c256_48, %c0_49] : memref<384x128xbf16, #tpu.memory_space<vmem>>, vector<128x128xbf16>
    %cst_50 = arith.constant dense<0.000000e+00> : vector<128x128xf32>
    %121 = tpu.matmul %119, %120, %cst_50 {dimension_numbers = #tpu.dot_dimension_numbers<[1], [0], [0], [1], [0, 0, 1, 1], [], []>} : vector<128x128xbf16>, vector<128x128xbf16>, vector<128x128xf32> -> vector<128x128xf32>
    %122 = arith.addf %118, %121 : vector<128x128xf32>
    %123 = arith.addf %1, %122 : vector<128x128xf32>
    %c0_51 = arith.constant 0 : index
    %c0_52 = arith.constant 0 : index
    %124 = vector.load %arg5[%c0_51, %c0_52] : memref<1x128xf32, #tpu.memory_space<vmem>>, vector<1x128xf32>
    %125 = vector.broadcast %124 : vector<1x128xf32> to vector<128x128xf32>
    %126 = arith.addf %123, %125 : vector<128x128xf32>
    %cst_53 = arith.constant 0.000000e+00 : f32
    %127 = vector.broadcast %cst_53 : f32 to vector<128x128xf32>
    %128 = arith.maximumf %126, %127 : vector<128x128xf32>
    %c0_54 = arith.constant 0 : index
    %c0_55 = arith.constant 0 : index
    %c0_56 = arith.constant 0 : index
    %129 = vector.load %arg6[%c0_54, %c0_55, %c0_56] : memref<1x128x128xf32, #tpu.memory_space<vmem>>, vector<1x128x128xf32>
    %130 = vector.shape_cast %129 : vector<1x128x128xf32> to vector<128x128xf32>
    %131 = vector.shape_cast %128 : vector<128x128xf32> to vector<1x128x128xf32>
    tpu.vector_store %arg6[%c0_54, %c0_55, %c0_56], %131 {strides = array<i32>} : memref<1x128x128xf32, #tpu.memory_space<vmem>>, vector<1x128x128xf32>,
    return
  }
  func.func @transform_0(%arg0: i32) -> (i32, i32, i32) {
    %c0_i32 = arith.constant 0 : i32
    %c0_i32_0 = arith.constant 0 : i32
    %c0_i32_1 = arith.constant 0 : i32
    return %arg0, %c0_i32, %c0_i32_0 : i32, i32, i32
  }
  func.func @transform_1(%arg0: i32) -> (i32, i32) {
    %c0_i32 = arith.constant 0 : i32
    %c0_i32_0 = arith.constant 0 : i32
    %c0_i32_1 = arith.constant 0 : i32
    return %c0_i32, %c0_i32_0 : i32, i32
  }
  func.func @transform_2(%arg0: i32) -> (i32, i32) {
    %c0_i32 = arith.constant 0 : i32
    %c0_i32_0 = arith.constant 0 : i32
    %c0_i32_1 = arith.constant 0 : i32
    return %c0_i32, %c0_i32_0 : i32, i32
  }
  func.func @transform_3(%arg0: i32) -> (i32, i32) {
    %c0_i32 = arith.constant 0 : i32
    %c0_i32_0 = arith.constant 0 : i32
    %c0_i32_1 = arith.constant 0 : i32
    return %c0_i32, %c0_i32_0 : i32, i32
  }
  func.func @transform_4(%arg0: i32) -> (i32, i32) {
    %c0_i32 = arith.constant 0 : i32
    %c0_i32_0 = arith.constant 0 : i32
    %c0_i32_1 = arith.constant 0 : i32
    return %c0_i32, %c0_i32_0 : i32, i32
  }
  func.func @transform_5(%arg0: i32) -> (i32, i32, i32) {
    %c0_i32 = arith.constant 0 : i32
    %c0_i32_0 = arith.constant 0 : i32
    %c0_i32_1 = arith.constant 0 : i32
    return %arg0, %c0_i32, %c0_i32_0 : i32, i32, i32
  }
}

</mosaic_0001>

<llo_original>
// kernel: tpu_custom_call.1
$region0: #{tpu_custom_call.1}
  #allocation0 [shape = 'u32[]', space=smem, size = 0x4, offset = 0x4, fixed_abs, tag = 'smem constant byte address 0x4 - core index']
  #allocation1 [shape = 'u32[144,128]{1,0:T(1,128)}', space=vmem, size = 0x12000, scoped, tag = 'internal scratch']
  %s0 = inlined_call_operand.hbm [shape: f32[2,128,128], index: 0, kind: input, shape index: {}]
  %s1 = inlined_call_operand.hbm [shape: bf16[384,128], index: 1, kind: input, shape index: {}]
  %s2 = inlined_call_operand.hbm [shape: bf16[384,128], index: 2, kind: input, shape index: {}]
  %s3 = inlined_call_operand.vmem [shape: f32[1,128], index: 3, kind: input, shape index: {}]
  %s4 = inlined_call_operand.vmem [shape: f32[1,128], index: 4, kind: input, shape index: {}]
  %s5 = inlined_call_operand.hbm [shape: f32[2,128,128], index: 5, kind: output, shape index: {}]
  %s6 = sld [smem:[#allocation0]]
  $region65: #{tpu_custom_call.1} parent=0
    _
  %s8 = ssub.s32 1, %s6
  %s9 = scalar_select 0, %s8, %s6
  $region1: #{tpu_custom_call.1} parent=0
    #allocation2 [shape = 'u8[131072]{0}', space=vmem, size = 0x20000, scoped, tag = 'input window, operand 0']
    #allocation3 [shape = 's32[2]{0}', space=sflag, size = 0x8, scoped, tag = 'scoped memory for tpu_custom_call.1']
    #allocation4 [shape = 's32[2]{0}', space=sflag, size = 0x8, scoped, tag = 'scoped memory for tpu_custom_call.1']
    #allocation5 [shape = 'u8[98304]{0}', space=vmem, size = 0x18000, scoped, tag = 'input window, operand 1, single buffered']
    #allocation6 [shape = 's32[1]{0}', space=sflag, size = 0x4, scoped, tag = 'scoped memory for tpu_custom_call.1']
    #allocation7 [shape = 'u8[98304]{0}', space=vmem, size = 0x18000, scoped, tag = 'input window, operand 2, single buffered']
    #allocation8 [shape = 'u8[131072]{0}', space=vmem, size = 0x20000, scoped, tag = 'output window, operand 0']
    %10 = vsyncpa [#allocation3], 0
    %s11 = scalar_lea.sflag [#allocation3], 1
    %12 = vsyncpa %s11, 0
    %13 = vsyncpa [#allocation6], 0
    %14 = vsyncpa [#allocation4], 0
    %s15 = scalar_lea.sflag [#allocation4], 1
    %16 = vsyncpa %s15, 0
    loop: start=0, step=1, limit=4
    $region2: #{tpu_custom_call.1} parent=1 // loop_pre_header
      _
    $region3: #{tpu_custom_call.1} parent=1 // loop_header
      %s18 = sphi 0, %s22
      %p19 = scmp.ge.s32.totalorder %s18, 4
      %s28 = sphi 0, %s30
      %s31 = sphi 0, %s28
      %s32 = sphi 0, %s31
      %s48 = sphi 0, %s32
      %s52 = sphi 0, %s52
      %s54 = sphi 0, %s52
      %s55 = sphi 0, %s54
      %s69 = sphi 0, %s55
      %s73 = sphi 0, %s73
      %s75 = sphi 0, %s73
      %s76 = sphi 0, %s75
      %s90 = sphi 0, %s76
      %s94 = sphi 0, %s94
      %s96 = sphi 0, %s94
      %s97 = sphi 0, %s96
      %s111 = sphi 0, %s97
      %s115 = sphi 0, %s115
      %s117 = sphi 0, %s115
      %s118 = sphi 0, %s117
      %s132 = sphi 0, %s118
      %s138 = sphi 0, %s140
      %s141 = sphi 0, %s138
      %s142 = sphi 0, %s141
      %s158 = sphi 0, %s142
    $region4: #{tpu_custom_call.1} parent=1 // loop_header_branch
      %21 = sbr.rel (%p19) target = $region8
    $region5: #{tpu_custom_call.1} parent=1 // loop_body
      %s23 = ssub.s32 %s18, 1
      %s24 = ssub.s32 %s18, 2
      %s25 = sadd.s32 %s18, 1
      %s26 = ssub.s32 %s18, %s25
      %p27 = scmp.eq.s32.totalorder %s26, 0
      %s29 = sadd.s32 %s28, 1
      %s30 = scalar_select %p27, %s28, %s29
      %p33 = pneg %p27
      %p34 = scmp.eq.s32.totalorder %s18, 1
      %p35 = por %p33, %p34
      %p36 = scmp.ne.s32.totalorder %s28, %s31
      %p37 = scmp.eq.s32.totalorder %s18, 0
      %p38 = por %p36, %p37
      %p39 = scmp.ne.s32.totalorder %s28, %s31
      %p40 = scmp.eq.s32.totalorder %s23, 1
      %p41 = por %p39, %p40
      %p42 = scmp.ne.s32.totalorder %s31, %s32
      %p43 = scmp.eq.s32.totalorder %s23, 0
      %p44 = por %p42, %p43
      %p45 = scmp.ne.s32.totalorder %s31, %s32
      %p46 = scmp.eq.s32.totalorder %s24, 1
      %p47 = por %p45, %p46
      %p49 = scmp.ne.s32.totalorder %s32, %s48
      %p50 = scmp.eq.s32.totalorder %s24, 0
      %p51 = por %p49, %p50
      %s53 = sadd.s32 %s52, 1
      %p56 = scmp.eq.s32.totalorder %s18, 1
      %p57 = scmp.ne.s32.totalorder %s52, %s54
      %p58 = scmp.eq.s32.totalorder %s18, 0
      %p59 = por %p57, %p58
      %p60 = scmp.ne.s32.totalorder %s52, %s54
      %p61 = scmp.eq.s32.totalorder %s23, 1
      %p62 = por %p60, %p61
      %p63 = scmp.ne.s32.totalorder %s54, %s55
      %p64 = scmp.eq.s32.totalorder %s23, 0
      %p65 = por %p63, %p64
      %p66 = scmp.ne.s32.totalorder %s54, %s55
      %p67 = scmp.eq.s32.totalorder %s24, 1
      %p68 = por %p66, %p67
      %p70 = scmp.ne.s32.totalorder %s55, %s69
      %p71 = scmp.eq.s32.totalorder %s24, 0
      %p72 = por %p70, %p71
      %s74 = sadd.s32 %s73, 1
      %p77 = scmp.eq.s32.totalorder %s18, 1
      %p78 = scmp.ne.s32.totalorder %s73, %s75
      %p79 = scmp.eq.s32.totalorder %s18, 0
      %p80 = por %p78, %p79
      %p81 = scmp.ne.s32.totalorder %s73, %s75
      %p82 = scmp.eq.s32.totalorder %s23, 1
      %p83 = por %p81, %p82
      %p84 = scmp.ne.s32.totalorder %s75, %s76
      %p85 = scmp.eq.s32.totalorder %s23, 0
      %p86 = por %p84, %p85
      %p87 = scmp.ne.s32.totalorder %s75, %s76
      %p88 = scmp.eq.s32.totalorder %s24, 1
      %p89 = por %p87, %p88
      %p91 = scmp.ne.s32.totalorder %s76, %s90
      %p92 = scmp.eq.s32.totalorder %s24, 0
      %p93 = por %p91, %p92
      %s95 = sadd.s32 %s94, 1
      %p98 = scmp.eq.s32.totalorder %s18, 1
      %p99 = scmp.ne.s32.totalorder %s94, %s96
      %p100 = scmp.eq.s32.totalorder %s18, 0
      %p101 = por %p99, %p100
      %p102 = scmp.ne.s32.totalorder %s94, %s96
      %p103 = scmp.eq.s32.totalorder %s23, 1
      %p104 = por %p102, %p103
      %p105 = scmp.ne.s32.totalorder %s96, %s97
      %p106 = scmp.eq.s32.totalorder %s23, 0
      %p107 = por %p105, %p106
      %p108 = scmp.ne.s32.totalorder %s96, %s97
      %p109 = scmp.eq.s32.totalorder %s24, 1
      %p110 = por %p108, %p109
      %p112 = scmp.ne.s32.totalorder %s97, %s111
      %p113 = scmp.eq.s32.totalorder %s24, 0
      %p114 = por %p112, %p113
      %s116 = sadd.s32 %s115, 1
      %p119 = scmp.eq.s32.totalorder %s18, 1
      %p120 = scmp.ne.s32.totalorder %s115, %s117
      %p121 = scmp.eq.s32.totalorder %s18, 0
      %p122 = por %p120, %p121
      %p123 = scmp.ne.s32.totalorder %s115, %s117
      %p124 = scmp.eq.s32.totalorder %s23, 1
      %p125 = por %p123, %p124
      %p126 = scmp.ne.s32.totalorder %s117, %s118
      %p127 = scmp.eq.s32.totalorder %s23, 0
      %p128 = por %p126, %p127
      %p129 = scmp.ne.s32.totalorder %s117, %s118
      %p130 = scmp.eq.s32.totalorder %s24, 1
      %p131 = por %p129, %p130
      %p133 = scmp.ne.s32.totalorder %s118, %s132
      %p134 = scmp.eq.s32.totalorder %s24, 0
      %p135 = por %p133, %p134
      %s136 = ssub.s32 %s18, %s25
      %p137 = scmp.eq.s32.totalorder %s136, 0
      %s139 = sadd.s32 %s138, 1
      %s140 = scalar_select %p137, %s138, %s139
      %p143 = pneg %p137
      %p144 = scmp.eq.s32.totalorder %s18, 1
      %p145 = por %p143, %p144
      %p146 = scmp.ne.s32.totalorder %s138, %s141
      %p147 = scmp.eq.s32.totalorder %s18, 0
      %p148 = por %p146, %p147
      %p149 = scmp.ne.s32.totalorder %s138, %s141
      %p150 = scmp.eq.s32.totalorder %s23, 1
      %p151 = por %p149, %p150
      %p152 = scmp.ne.s32.totalorder %s141, %s142
      %p153 = scmp.eq.s32.totalorder %s23, 0
      %p154 = por %p152, %p153
      %p155 = scmp.ne.s32.totalorder %s141, %s142
      %p156 = scmp.eq.s32.totalorder %s24, 1
      %p157 = por %p155, %p156
      %p159 = scmp.ne.s32.totalorder %s142, %s158
      %p160 = scmp.eq.s32.totalorder %s24, 0
      %p161 = por %p159, %p160
      %p162 = scmp.le.s32.totalorder 1, %s18
      %p163 = scmp.lt.s32.totalorder %s18, 3
      %p164 = pnand %p162, %p163
      %p165 = pneg %p164
      // Predicated region
      $region9: #{tpu_custom_call.1} parent=5 // pred_check
        _
      $region10: #{tpu_custom_call.1} parent=5 // pred_check_branch
        %167 = sbr.rel (%p164) target = $region12
      $region11: #{tpu_custom_call.1} parent=5 // pred_region
        %s168 = ssub.s32 %s18, 1
        // Predicated region
        $region13: #{tpu_custom_call.1} parent=11 // pred_check
          %p169 = pneg %p65
        $region14: #{tpu_custom_call.1} parent=11 // pred_check_branch
          %171 = sbr.rel (%p169) target = $region16
        $region15: #{tpu_custom_call.1} parent=11 // pred_region
          %s173 = ssub.s32 3072, 3072
          %174 = vsyncadd [#allocation6], %s173
          %s175 = sshll.u32 [#allocation5], 4
          %s176 = int_to_ptr.vmem [resolvable:$true] %s175
          %181 = dma.hbm_to_vmem [thread:$0]  %s1, 3072, %s176, [#allocation6], 64, 64, 4
        $region16: #{tpu_custom_call.1} parent=11 // pred_fallthru
          _
        // Predicated region
        $region17: #{tpu_custom_call.1} parent=11 // pred_check
          %p182 = pneg %p86
        $region18: #{tpu_custom_call.1} parent=11 // pred_check_branch
          %184 = sbr.rel (%p182) target = $region20
        $region19: #{tpu_custom_call.1} parent=11 // pred_region
          %s186 = ssub.s32 3072, 3072
          %187 = vsyncadd [#allocation6], %s186
          %s188 = sshll.u32 [#allocation7], 4
          %s189 = int_to_ptr.vmem [resolvable:$true] %s188
          %194 = dma.hbm_to_vmem [thread:$0]  %s2, 3072, %s189, [#allocation6], 64, 64, 4
        $region20: #{tpu_custom_call.1} parent=11 // pred_fallthru
          _
        // Predicated region
        $region21: #{tpu_custom_call.1} parent=11 // pred_check
          %p195 = pneg %p107
        $region22: #{tpu_custom_call.1} parent=11 // pred_check_branch
          %197 = sbr.rel (%p195) target = $region24
        $region23: #{tpu_custom_call.1} parent=11 // pred_region
          _
        $region24: #{tpu_custom_call.1} parent=11 // pred_fallthru
          _
        // Predicated region
        $region25: #{tpu_custom_call.1} parent=11 // pred_check
          %p198 = pneg %p128
        $region26: #{tpu_custom_call.1} parent=11 // pred_check_branch
          %200 = sbr.rel (%p198) target = $region28
        $region27: #{tpu_custom_call.1} parent=11 // pred_region
          _
        $region28: #{tpu_custom_call.1} parent=11 // pred_fallthru
          _
      $region12: #{tpu_custom_call.1} parent=5 // pred_fallthru
        _
      %p201 = scmp.lt.s32.totalorder %s18, 2
      // Predicated region
      $region29: #{tpu_custom_call.1} parent=5 // pred_check
        %p202 = pneg %p201
      $region30: #{tpu_custom_call.1} parent=5 // pred_check_branch
        %204 = sbr.rel (%p202) target = $region32
      $region31: #{tpu_custom_call.1} parent=5 // pred_region
        // Predicated region
        $region33: #{tpu_custom_call.1} parent=31 // pred_check
          %p205 = pneg %p38
        $region34: #{tpu_custom_call.1} parent=31 // pred_check_branch
          %207 = sbr.rel (%p205) target = $region36
        $region35: #{tpu_custom_call.1} parent=31 // pred_region
          %s208 = sand.u32 %s28, 1
          %s209 = scalar_lea.sflag [#allocation3], %s208
          %s210 = sand.u32 %s28, 1
          %s211 = smul.addr %s210, 128
          %s212 = scalar_lea.vmem [#allocation2], %s211
          %s214 = ssub.s32 2048, 2048
          %215 = vsyncadd %s209, %s214
          %s216 = smul.addr %s18, 16
          %s217 = smul.addr %s216, 128
          %s218 = scalar_lea.hbm %s0, %s217
          %s219 = sshll.u32 %s212, 4
          %s220 = int_to_ptr.vmem [resolvable:$true] %s219
          %225 = dma.hbm_to_vmem [thread:$0]  %s218, 2048, %s220, %s209, 128, 128, 8
        $region36: #{tpu_custom_call.1} parent=31 // pred_fallthru
          _
      $region32: #{tpu_custom_call.1} parent=5 // pred_fallthru
        _
      %p226 = scmp.le.s32.totalorder 1, %s18
      %p227 = scmp.lt.s32.totalorder %s18, 3
      %p228 = pnand %p226, %p227
      %p229 = pneg %p228
      // Predicated region
      $region37: #{tpu_custom_call.1} parent=5 // pred_check
        _
      $region38: #{tpu_custom_call.1} parent=5 // pred_check_branch
        %231 = sbr.rel (%p228) target = $region40
      $region39: #{tpu_custom_call.1} parent=5 // pred_region
        %s232 = ssub.s32 %s18, 1
        %s233 = sand.u32 %s31, 1
        %s234 = scalar_lea.sflag [#allocation3], %s233
        %s235 = sand.u32 %s31, 1
        %s236 = smul.addr %s235, 128
        %s237 = scalar_lea.vmem [#allocation2], %s236
        // Predicated region
        $region41: #{tpu_custom_call.1} parent=39 // pred_check
          %p238 = pneg %p44
        $region42: #{tpu_custom_call.1} parent=39 // pred_check_branch
          %240 = sbr.rel (%p238) target = $region44
        $region43: #{tpu_custom_call.1} parent=39 // pred_region
          %241 = dma.done %s234, 2048
        $region44: #{tpu_custom_call.1} parent=39 // pred_fallthru
          _
        // Predicated region
        $region45: #{tpu_custom_call.1} parent=39 // pred_check
          %p242 = pneg %p65
        $region46: #{tpu_custom_call.1} parent=39 // pred_check_branch
          %244 = sbr.rel (%p242) target = $region48
        $region47: #{tpu_custom_call.1} parent=39 // pred_region
          %245 = dma.done [#allocation6], 3072
        $region48: #{tpu_custom_call.1} parent=39 // pred_fallthru
          _
        // Predicated region
        $region49: #{tpu_custom_call.1} parent=39 // pred_check
          %p246 = pneg %p86
        $region50: #{tpu_custom_call.1} parent=39 // pred_check_branch
          %248 = sbr.rel (%p246) target = $region52
        $region51: #{tpu_custom_call.1} parent=39 // pred_region
          %249 = dma.done [#allocation6], 3072
        $region52: #{tpu_custom_call.1} parent=39 // pred_fallthru
          _
        %s250 = sand.u32 %s31, 1
        %s251 = scalar_lea.sflag [#allocation3], %s250
        %s252 = sand.u32 %s31, 1
        %s253 = smul.addr %s252, 128
        %s254 = scalar_lea.vmem [#allocation2], %s253
        %p255 = pneg %p44
        %p256 = pneg %p41
        %p257 = pneg %p65
        %p258 = pneg %p62
        %p259 = pneg %p86
        %p260 = pneg %p83
        %p261 = pneg %p107
        %p262 = pneg %p104
        %p263 = pneg %p128
        %p264 = pneg %p125
        %p265 = pneg %p154
        %p266 = pneg %p151
        %s267 = sand.u32 %s141, 1
        %s268 = scalar_lea.sflag [#allocation4], %s267
        %s269 = sand.u32 %s141, 1
        %s270 = smul.addr %s269, 128
        %s271 = scalar_lea.vmem [#allocation8], %s270
        %v273 = vld [vmem:[%s237] sm:$0xff]
        %v274 = vld [vmem:[%s237 + $0x8] sm:$0xff]
        %v275 = vld [vmem:[%s237 + $0x10] sm:$0xff]
        %v276 = vld [vmem:[%s237 + $0x18] sm:$0xff]
        %v277 = vld [vmem:[%s237 + $0x20] sm:$0xff]
        %v278 = vld [vmem:[%s237 + $0x28] sm:$0xff]
        %v279 = vld [vmem:[%s237 + $0x30] sm:$0xff]
        %v280 = vld [vmem:[%s237 + $0x38] sm:$0xff]
        %v281 = vld [vmem:[%s237 + $0x40] sm:$0xff]
        %v282 = vld [vmem:[%s237 + $0x48] sm:$0xff]
        %v283 = vld [vmem:[%s237 + $0x50] sm:$0xff]
        %v284 = vld [vmem:[%s237 + $0x58] sm:$0xff]
        %v285 = vld [vmem:[%s237 + $0x60] sm:$0xff]
        %v286 = vld [vmem:[%s237 + $0x68] sm:$0xff]
        %v287 = vld [vmem:[%s237 + $0x70] sm:$0xff]
        %v288 = vld [vmem:[%s237 + $0x78] sm:$0xff]
        %v289 = vlaneseq
        %v290 = vshrl.u32 %v289, 7
        %v291 = vadd.s32 %v290, 8
        %v292 = vadd.s32 %v290, 16
        %v293 = vadd.s32 %v290, 24
        %v294 = vadd.s32 %v290, 32
        %v295 = vadd.s32 %v290, 40
        %v296 = vadd.s32 %v290, 48
        %v297 = vadd.s32 %v290, 56
        %v298 = vadd.s32 %v290, 64
        %v299 = vadd.s32 %v290, 72
        %v300 = vadd.s32 %v290, 80
        %v301 = vadd.s32 %v290, 88
        %v302 = vadd.s32 %v290, 96
        %v303 = vadd.s32 %v290, 104
        %v304 = vadd.s32 %v290, 112
        %v305 = vadd.s32 %v290, 120
        %vm306 = vcmp.lt.s32.totalorder %v290, 0
        %v307 = vsub.s32 0, %v290
        %v308 = vsel %vm306, %v307, %v290
        %v309 = vshrl.u32 %v308, 4
        %v310 = vand.u32 %v308, 15
        %v311 = vsub.s32 0, %v310
        %v312 = vsel %vm306, %v311, %v310
        %vm313 = vcmp.lt.s32.totalorder %v291, 0
        %v314 = vsub.s32 0, %v291
        %v315 = vsel %vm313, %v314, %v291
        %v316 = vshrl.u32 %v315, 4
        %v317 = vand.u32 %v315, 15
        %v318 = vsub.s32 0, %v317
        %v319 = vsel %vm313, %v318, %v317
        %vm320 = vcmp.lt.s32.totalorder %v292, 0
        %v321 = vsub.s32 0, %v292
        %v322 = vsel %vm320, %v321, %v292
        %v323 = vshrl.u32 %v322, 4
        %v324 = vand.u32 %v322, 15
        %v325 = vsub.s32 0, %v324
        %v326 = vsel %vm320, %v325, %v324
        %vm327 = vcmp.lt.s32.totalorder %v293, 0
        %v328 = vsub.s32 0, %v293
        %v329 = vsel %vm327, %v328, %v293
        %v330 = vshrl.u32 %v329, 4
        %v331 = vand.u32 %v329, 15
        %v332 = vsub.s32 0, %v331
        %v333 = vsel %vm327, %v332, %v331
        %vm334 = vcmp.lt.s32.totalorder %v294, 0
        %v335 = vsub.s32 0, %v294
        %v336 = vsel %vm334, %v335, %v294
        %v337 = vshrl.u32 %v336, 4
        %v338 = vand.u32 %v336, 15
        %v339 = vsub.s32 0, %v338
        %v340 = vsel %vm334, %v339, %v338
        %vm341 = vcmp.lt.s32.totalorder %v295, 0
        %v342 = vsub.s32 0, %v295
        %v343 = vsel %vm341, %v342, %v295
        %v344 = vshrl.u32 %v343, 4
        %v345 = vand.u32 %v343, 15
        %v346 = vsub.s32 0, %v345
        %v347 = vsel %vm341, %v346, %v345
        %vm348 = vcmp.lt.s32.totalorder %v296, 0
        %v349 = vsub.s32 0, %v296
        %v350 = vsel %vm348, %v349, %v296
        %v351 = vshrl.u32 %v350, 4
        %v352 = vand.u32 %v350, 15
        %v353 = vsub.s32 0, %v352
        %v354 = vsel %vm348, %v353, %v352
        %vm355 = vcmp.lt.s32.totalorder %v297, 0
        %v356 = vsub.s32 0, %v297
        %v357 = vsel %vm355, %v356, %v297
        %v358 = vshrl.u32 %v357, 4
        %v359 = vand.u32 %v357, 15
        %v360 = vsub.s32 0, %v359
        %v361 = vsel %vm355, %v360, %v359
        %vm362 = vcmp.lt.s32.totalorder %v298, 0
        %v363 = vsub.s32 0, %v298
        %v364 = vsel %vm362, %v363, %v298
        %v365 = vshrl.u32 %v364, 4
        %v366 = vand.u32 %v364, 15
        %v367 = vsub.s32 0, %v366
        %v368 = vsel %vm362, %v367, %v366
        %vm369 = vcmp.lt.s32.totalorder %v299, 0
        %v370 = vsub.s32 0, %v299
        %v371 = vsel %vm369, %v370, %v299
        %v372 = vshrl.u32 %v371, 4
        %v373 = vand.u32 %v371, 15
        %v374 = vsub.s32 0, %v373
        %v375 = vsel %vm369, %v374, %v373
        %vm376 = vcmp.lt.s32.totalorder %v300, 0
        %v377 = vsub.s32 0, %v300
        %v378 = vsel %vm376, %v377, %v300
        %v379 = vshrl.u32 %v378, 4
        %v380 = vand.u32 %v378, 15
        %v381 = vsub.s32 0, %v380
        %v382 = vsel %vm376, %v381, %v380
        %vm383 = vcmp.lt.s32.totalorder %v301, 0
        %v384 = vsub.s32 0, %v301
        %v385 = vsel %vm383, %v384, %v301
        %v386 = vshrl.u32 %v385, 4
        %v387 = vand.u32 %v385, 15
        %v388 = vsub.s32 0, %v387
        %v389 = vsel %vm383, %v388, %v387
        %vm390 = vcmp.lt.s32.totalorder %v302, 0
        %v391 = vsub.s32 0, %v302
        %v392 = vsel %vm390, %v391, %v302
        %v393 = vshrl.u32 %v392, 4
        %v394 = vand.u32 %v392, 15
        %v395 = vsub.s32 0, %v394
        %v396 = vsel %vm390, %v395, %v394
        %vm397 = vcmp.lt.s32.totalorder %v303, 0
        %v398 = vsub.s32 0, %v303
        %v399 = vsel %vm397, %v398, %v303
        %v400 = vshrl.u32 %v399, 4
        %v401 = vand.u32 %v399, 15
        %v402 = vsub.s32 0, %v401
        %v403 = vsel %vm397, %v402, %v401
        %vm404 = vcmp.lt.s32.totalorder %v304, 0
        %v405 = vsub.s32 0, %v304
        %v406 = vsel %vm404, %v405, %v304
        %v407 = vshrl.u32 %v406, 4
        %v408 = vand.u32 %v406, 15
        %v409 = vsub.s32 0, %v408
        %v410 = vsel %vm404, %v409, %v408
        %vm411 = vcmp.lt.s32.totalorder %v305, 0
        %v412 = vsub.s32 0, %v305
        %v413 = vsel %vm411, %v412, %v305
        %v414 = vshrl.u32 %v413, 4
        %v415 = vand.u32 %v413, 15
        %v416 = vsub.s32 0, %v415
        %v417 = vsel %vm411, %v416, %v415
        %vm418 = vcmp.ne.s32.totalorder %v312, 0
        %vm419 = vcmp.ne.s32.totalorder %v319, 0
        %vm420 = vcmp.ne.s32.totalorder %v326, 0
        %vm421 = vcmp.ne.s32.totalorder %v333, 0
        %vm422 = vcmp.ne.s32.totalorder %v340, 0
        %vm423 = vcmp.ne.s32.totalorder %v347, 0
        %vm424 = vcmp.ne.s32.totalorder %v354, 0
        %vm425 = vcmp.ne.s32.totalorder %v361, 0
        %vm426 = vcmp.ne.s32.totalorder %v368, 0
        %vm427 = vcmp.ne.s32.totalorder %v375, 0
        %vm428 = vcmp.ne.s32.totalorder %v382, 0
        %vm429 = vcmp.ne.s32.totalorder %v389, 0
        %vm430 = vcmp.ne.s32.totalorder %v396, 0
        %vm431 = vcmp.ne.s32.totalorder %v403, 0
        %vm432 = vcmp.ne.s32.totalorder %v410, 0
        %vm433 = vcmp.ne.s32.totalorder %v417, 0
        %vm434 = vcmp.lt.s32.totalorder %v312, 0
        %vm435 = vcmp.lt.s32.totalorder %v319, 0
        %vm436 = vcmp.lt.s32.totalorder %v326, 0
        %vm437 = vcmp.lt.s32.totalorder %v333, 0
        %vm438 = vcmp.lt.s32.totalorder %v340, 0
        %vm439 = vcmp.lt.s32.totalorder %v347, 0
        %vm440 = vcmp.lt.s32.totalorder %v354, 0
        %vm441 = vcmp.lt.s32.totalorder %v361, 0
        %vm442 = vcmp.lt.s32.totalorder %v368, 0
        %vm443 = vcmp.lt.s32.totalorder %v375, 0
        %vm444 = vcmp.lt.s32.totalorder %v382, 0
        %vm445 = vcmp.lt.s32.totalorder %v389, 0
        %vm446 = vcmp.lt.s32.totalorder %v396, 0
        %vm447 = vcmp.lt.s32.totalorder %v403, 0
        %vm448 = vcmp.lt.s32.totalorder %v410, 0
        %vm449 = vcmp.lt.s32.totalorder %v417, 0
        %vm450 = vmand %vm434, %vm418
        %vm451 = vmand %vm435, %vm419
        %vm452 = vmand %vm436, %vm420
        %vm453 = vmand %vm437, %vm421
        %vm454 = vmand %vm438, %vm422
        %vm455 = vmand %vm439, %vm423
        %vm456 = vmand %vm440, %vm424
        %vm457 = vmand %vm441, %vm425
        %vm458 = vmand %vm442, %vm426
        %vm459 = vmand %vm443, %vm427
        %vm460 = vmand %vm444, %vm428
        %vm461 = vmand %vm445, %vm429
        %vm462 = vmand %vm446, %vm430
        %vm463 = vmand %vm447, %vm431
        %vm464 = vmand %vm448, %vm432
        %vm465 = vmand %vm449, %vm433
        %v466 = vadd.s32 %v312, 16
        %v467 = vadd.s32 %v319, 16
        %v468 = vadd.s32 %v326, 16
        %v469 = vadd.s32 %v333, 16
        %v470 = vadd.s32 %v340, 16
        %v471 = vadd.s32 %v347, 16
        %v472 = vadd.s32 %v354, 16
        %v473 = vadd.s32 %v361, 16
        %v474 = vadd.s32 %v368, 16
        %v475 = vadd.s32 %v375, 16
        %v476 = vadd.s32 %v382, 16
        %v477 = vadd.s32 %v389, 16
        %v478 = vadd.s32 %v396, 16
        %v479 = vadd.s32 %v403, 16
        %v480 = vadd.s32 %v410, 16
        %v481 = vadd.s32 %v417, 16
        %v482 = vsel %vm450, %v466, %v312
        %v483 = vsel %vm451, %v467, %v319
        %v484 = vsel %vm452, %v468, %v326
        %v485 = vsel %vm453, %v469, %v333
        %v486 = vsel %vm454, %v470, %v340
        %v487 = vsel %vm455, %v471, %v347
        %v488 = vsel %vm456, %v472, %v354
        %v489 = vsel %vm457, %v473, %v361
        %v490 = vsel %vm458, %v474, %v368
        %v491 = vsel %vm459, %v475, %v375
        %v492 = vsel %vm460, %v476, %v382
        %v493 = vsel %vm461, %v477, %v389
        %v494 = vsel %vm462, %v478, %v396
        %v495 = vsel %vm463, %v479, %v403
        %v496 = vsel %vm464, %v480, %v410
        %v497 = vsel %vm465, %v481, %v417
        %vm498 = vcmp.ne.s32.totalorder %v482, 0
        %vm499 = vcmp.ne.s32.totalorder %v483, 0
        %vm500 = vcmp.ne.s32.totalorder %v484, 0
        %vm501 = vcmp.ne.s32.totalorder %v485, 0
        %vm502 = vcmp.ne.s32.totalorder %v486, 0
        %vm503 = vcmp.ne.s32.totalorder %v487, 0
        %vm504 = vcmp.ne.s32.totalorder %v488, 0
        %vm505 = vcmp.ne.s32.totalorder %v489, 0
        %vm506 = vcmp.ne.s32.totalorder %v490, 0
        %vm507 = vcmp.ne.s32.totalorder %v491, 0
        %vm508 = vcmp.ne.s32.totalorder %v492, 0
        %vm509 = vcmp.ne.s32.totalorder %v493, 0
        %vm510 = vcmp.ne.s32.totalorder %v494, 0
        %vm511 = vcmp.ne.s32.totalorder %v495, 0
        %vm512 = vcmp.ne.s32.totalorder %v496, 0
        %vm513 = vcmp.ne.s32.totalorder %v497, 0
        %vm514 = vcmp.ne.s32.totalorder %v482, 15
        %vm515 = vcmp.ne.s32.totalorder %v483, 15
        %vm516 = vcmp.ne.s32.totalorder %v484, 15
        %vm517 = vcmp.ne.s32.totalorder %v485, 15
        %vm518 = vcmp.ne.s32.totalorder %v486, 15
        %vm519 = vcmp.ne.s32.totalorder %v487, 15
        %vm520 = vcmp.ne.s32.totalorder %v488, 15
        %vm521 = vcmp.ne.s32.totalorder %v489, 15
        %vm522 = vcmp.ne.s32.totalorder %v490, 15
        %vm523 = vcmp.ne.s32.totalorder %v491, 15
        %vm524 = vcmp.ne.s32.totalorder %v492, 15
        %vm525 = vcmp.ne.s32.totalorder %v493, 15
        %vm526 = vcmp.ne.s32.totalorder %v494, 15
        %vm527 = vcmp.ne.s32.totalorder %v495, 15
        %vm528 = vcmp.ne.s32.totalorder %v496, 15
        %vm529 = vcmp.ne.s32.totalorder %v497, 15
        %v530 = vrot.slane %v273, 7
        %v531 = vrot.slane %v274, 7
        %v532 = vrot.slane %v275, 7
        %v533 = vrot.slane %v276, 7
        %v534 = vrot.slane %v277, 7
        %v535 = vrot.slane %v278, 7
        %v536 = vrot.slane %v279, 7
        %v537 = vrot.slane %v280, 7
        %v538 = vrot.slane %v281, 7
        %v539 = vrot.slane %v282, 7
        %v540 = vrot.slane %v283, 7
        %v541 = vrot.slane %v284, 7
        %v542 = vrot.slane %v285, 7
        %v543 = vrot.slane %v286, 7
        %v544 = vrot.slane %v287, 7
        %v545 = vrot.slane %v288, 7
        %vm546 = vcmp.lt.s32.totalorder %v290, 1
        %v547 = vsel %vm546, %v544, %v545
        %v548 = vsel %vm546, %v543, %v544
        %v549 = vsel %vm546, %v542, %v543
        %v550 = vsel %vm546, %v541, %v542
        %v551 = vsel %vm546, %v540, %v541
        %v552 = vsel %vm546, %v539, %v540
        %v553 = vsel %vm546, %v538, %v539
        %v554 = vsel %vm546, %v537, %v538
        %v555 = vsel %vm546, %v536, %v537
        %v556 = vsel %vm546, %v535, %v536
        %v557 = vsel %vm546, %v534, %v535
        %v558 = vsel %vm546, %v533, %v534
        %v559 = vsel %vm546, %v532, %v533
        %v560 = vsel %vm546, %v531, %v532
        %v561 = vsel %vm546, %v530, %v531
        %v562 = vsel %vm546, %v545, %v530
        %v563 = vsel %vm498, 1, 0
        %v564 = vsel %vm499, 1, 0
        %v565 = vsel %vm500, 1, 0
        %v566 = vsel %vm501, 1, 0
        %v567 = vsel %vm502, 1, 0
        %v568 = vsel %vm503, 1, 0
        %v569 = vsel %vm504, 1, 0
        %v570 = vsel %vm505, 1, 0
        %v571 = vsel %vm506, 1, 0
        %v572 = vsel %vm507, 1, 0
        %v573 = vsel %vm508, 1, 0
        %v574 = vsel %vm509, 1, 0
        %v575 = vsel %vm510, 1, 0
        %v576 = vsel %vm511, 1, 0
        %v577 = vsel %vm512, 1, 0
        %v578 = vsel %vm513, 1, 0
        %vm579 = vcmp.eq.s32.totalorder %v563, 1
        %vm580 = vcmp.eq.s32.totalorder %v564, 1
        %vm581 = vcmp.eq.s32.totalorder %v565, 1
        %vm582 = vcmp.eq.s32.totalorder %v566, 1
        %vm583 = vcmp.eq.s32.totalorder %v567, 1
        %vm584 = vcmp.eq.s32.totalorder %v568, 1
        %vm585 = vcmp.eq.s32.totalorder %v569, 1
        %vm586 = vcmp.eq.s32.totalorder %v570, 1
        %vm587 = vcmp.eq.s32.totalorder %v571, 1
        %vm588 = vcmp.eq.s32.totalorder %v572, 1
        %vm589 = vcmp.eq.s32.totalorder %v573, 1
        %vm590 = vcmp.eq.s32.totalorder %v574, 1
        %vm591 = vcmp.eq.s32.totalorder %v575, 1
        %vm592 = vcmp.eq.s32.totalorder %v576, 1
        %vm593 = vcmp.eq.s32.totalorder %v577, 1
        %vm594 = vcmp.eq.s32.totalorder %v578, 1
        %v595 = vsel %vm579, %v562, 0.0
        %v596 = vsel %vm580, %v561, 0.0
        %v597 = vsel %vm581, %v560, 0.0
        %v598 = vsel %vm582, %v559, 0.0
        %v599 = vsel %vm583, %v558, 0.0
        %v600 = vsel %vm584, %v557, 0.0
        %v601 = vsel %vm585, %v556, 0.0
        %v602 = vsel %vm586, %v555, 0.0
        %v603 = vsel %vm587, %v554, 0.0
        %v604 = vsel %vm588, %v553, 0.0
        %v605 = vsel %vm589, %v552, 0.0
        %v606 = vsel %vm590, %v551, 0.0
        %v607 = vsel %vm591, %v550, 0.0
        %v608 = vsel %vm592, %v549, 0.0
        %v609 = vsel %vm593, %v548, 0.0
        %v610 = vsel %vm594, %v547, 0.0
        %v611 = vrot.slane %v273, 1
        %v612 = vrot.slane %v274, 1
        %v613 = vrot.slane %v275, 1
        %v614 = vrot.slane %v276, 1
        %v615 = vrot.slane %v277, 1
        %v616 = vrot.slane %v278, 1
        %v617 = vrot.slane %v279, 1
        %v618 = vrot.slane %v280, 1
        %v619 = vrot.slane %v281, 1
        %v620 = vrot.slane %v282, 1
        %v621 = vrot.slane %v283, 1
        %v622 = vrot.slane %v284, 1
        %v623 = vrot.slane %v285, 1
        %v624 = vrot.slane %v286, 1
        %v625 = vrot.slane %v287, 1
        %v626 = vrot.slane %v288, 1
        %vm627 = vcmp.lt.s32.totalorder %v290, 7
        %v628 = vsel %vm627, %v625, %v626
        %v629 = vsel %vm627, %v624, %v625
        %v630 = vsel %vm627, %v623, %v624
        %v631 = vsel %vm627, %v622, %v623
        %v632 = vsel %vm627, %v621, %v622
        %v633 = vsel %vm627, %v620, %v621
        %v634 = vsel %vm627, %v619, %v620
        %v635 = vsel %vm627, %v618, %v619
        %v636 = vsel %vm627, %v617, %v618
        %v637 = vsel %vm627, %v616, %v617
        %v638 = vsel %vm627, %v615, %v616
        %v639 = vsel %vm627, %v614, %v615
        %v640 = vsel %vm627, %v613, %v614
        %v641 = vsel %vm627, %v612, %v613
        %v642 = vsel %vm627, %v611, %v612
        %v643 = vsel %vm627, %v626, %v611
        %v644 = vsel %vm514, 1, 0
        %v645 = vsel %vm515, 1, 0
        %v646 = vsel %vm516, 1, 0
        %v647 = vsel %vm517, 1, 0
        %v648 = vsel %vm518, 1, 0
        %v649 = vsel %vm519, 1, 0
        %v650 = vsel %vm520, 1, 0
        %v651 = vsel %vm521, 1, 0
        %v652 = vsel %vm522, 1, 0
        %v653 = vsel %vm523, 1, 0
        %v654 = vsel %vm524, 1, 0
        %v655 = vsel %vm525, 1, 0
        %v656 = vsel %vm526, 1, 0
        %v657 = vsel %vm527, 1, 0
        %v658 = vsel %vm528, 1, 0
        %v659 = vsel %vm529, 1, 0
        %vm660 = vcmp.eq.s32.totalorder %v644, 1
        %vm661 = vcmp.eq.s32.totalorder %v645, 1
        %vm662 = vcmp.eq.s32.totalorder %v646, 1
        %vm663 = vcmp.eq.s32.totalorder %v647, 1
        %vm664 = vcmp.eq.s32.totalorder %v648, 1
        %vm665 = vcmp.eq.s32.totalorder %v649, 1
        %vm666 = vcmp.eq.s32.totalorder %v650, 1
        %vm667 = vcmp.eq.s32.totalorder %v651, 1
        %vm668 = vcmp.eq.s32.totalorder %v652, 1
        %vm669 = vcmp.eq.s32.totalorder %v653, 1
        %vm670 = vcmp.eq.s32.totalorder %v654, 1
        %vm671 = vcmp.eq.s32.totalorder %v655, 1
        %vm672 = vcmp.eq.s32.totalorder %v656, 1
        %vm673 = vcmp.eq.s32.totalorder %v657, 1
        %vm674 = vcmp.eq.s32.totalorder %v658, 1
        %vm675 = vcmp.eq.s32.totalorder %v659, 1
        %v676 = vsel %vm660, %v642, 0.0
        %v677 = vsel %vm661, %v641, 0.0
        %v678 = vsel %vm662, %v640, 0.0
        %v679 = vsel %vm663, %v639, 0.0
        %v680 = vsel %vm664, %v638, 0.0
        %v681 = vsel %vm665, %v637, 0.0
        %v682 = vsel %vm666, %v636, 0.0
        %v683 = vsel %vm667, %v635, 0.0
        %v684 = vsel %vm668, %v634, 0.0
        %v685 = vsel %vm669, %v633, 0.0
        %v686 = vsel %vm670, %v632, 0.0
        %v687 = vsel %vm671, %v631, 0.0
        %v688 = vsel %vm672, %v630, 0.0
        %v689 = vsel %vm673, %v629, 0.0
        %v690 = vsel %vm674, %v628, 0.0
        %v691 = vsel %vm675, %v643, 0.0
        %v692 = vpack.c.bf16 %v596, %v595
        %v693 = vpack.c.bf16 %v598, %v597
        %v694 = vpack.c.bf16 %v600, %v599
        %v695 = vpack.c.bf16 %v602, %v601
        %v696 = vpack.c.bf16 %v604, %v603
        %v697 = vpack.c.bf16 %v606, %v605
        %v698 = vpack.c.bf16 %v608, %v607
        %v699 = vpack.c.bf16 %v610, %v609
        %v700 = vld [vmem:[#allocation5] sm:$0xf]
        %v701 = vld [vmem:[#allocation5 + $0x4] sm:$0xf]
        %v702 = vld [vmem:[#allocation5 + $0x8] sm:$0xf]
        %v703 = vld [vmem:[#allocation5 + $0xc] sm:$0xf]
        %v704 = vld [vmem:[#allocation5 + $0x10] sm:$0xf]
        %v705 = vld [vmem:[#allocation5 + $0x14] sm:$0xf]
        %v706 = vld [vmem:[#allocation5 + $0x18] sm:$0xf]
        %v707 = vld [vmem:[#allocation5 + $0x1c] sm:$0xf]
        %v708 = vld [vmem:[#allocation5 + $0x20] sm:$0xf]
        %v709 = vld [vmem:[#allocation5 + $0x24] sm:$0xf]
        %v710 = vld [vmem:[#allocation5 + $0x28] sm:$0xf]
        %v711 = vld [vmem:[#allocation5 + $0x2c] sm:$0xf]
        %v712 = vld [vmem:[#allocation5 + $0x30] sm:$0xf]
        %v713 = vld [vmem:[#allocation5 + $0x34] sm:$0xf]
        %v714 = vld [vmem:[#allocation5 + $0x38] sm:$0xf]
        %v715 = vld [vmem:[#allocation5 + $0x3c] sm:$0xf]
        %v716 = vpack.c.bf16 %v274, %v273
        %v717 = vpack.c.bf16 %v276, %v275
        %v718 = vpack.c.bf16 %v278, %v277
        %v719 = vpack.c.bf16 %v280, %v279
        %v720 = vpack.c.bf16 %v282, %v281
        %v721 = vpack.c.bf16 %v284, %v283
        %v722 = vpack.c.bf16 %v286, %v285
        %v723 = vpack.c.bf16 %v288, %v287
        %v724 = vld [vmem:[#allocation5 + $0x40] sm:$0xf]
        %v725 = vld [vmem:[#allocation5 + $0x44] sm:$0xf]
        %v726 = vld [vmem:[#allocation5 + $0x48] sm:$0xf]
        %v727 = vld [vmem:[#allocation5 + $0x4c] sm:$0xf]
        %v728 = vld [vmem:[#allocation5 + $0x50] sm:$0xf]
        %v729 = vld [vmem:[#allocation5 + $0x54] sm:$0xf]
        %v730 = vld [vmem:[#allocation5 + $0x58] sm:$0xf]
        %v731 = vld [vmem:[#allocation5 + $0x5c] sm:$0xf]
        %v732 = vld [vmem:[#allocation5 + $0x60] sm:$0xf]
        %v733 = vld [vmem:[#allocation5 + $0x64] sm:$0xf]
        %v734 = vld [vmem:[#allocation5 + $0x68] sm:$0xf]
        %v735 = vld [vmem:[#allocation5 + $0x6c] sm:$0xf]
        %v736 = vld [vmem:[#allocation5 + $0x70] sm:$0xf]
        %v737 = vld [vmem:[#allocation5 + $0x74] sm:$0xf]
        %v738 = vld [vmem:[#allocation5 + $0x78] sm:$0xf]
        %v739 = vld [vmem:[#allocation5 + $0x7c] sm:$0xf]
        %v756 = vunpack.c.l.b16 %v724
        %v757 = vunpack.c.l.b16 %v725
        %v758 = vunpack.c.l.b16 %v726
        %v759 = vunpack.c.l.b16 %v727
        %v760 = vunpack.c.l.b16 %v728
        %v761 = vunpack.c.l.b16 %v729
        %v762 = vunpack.c.l.b16 %v730
        %v763 = vunpack.c.l.b16 %v731
        %v764 = vunpack.c.l.b16 %v732
        %v765 = vunpack.c.l.b16 %v733
        %v766 = vunpack.c.l.b16 %v734
        %v767 = vunpack.c.l.b16 %v735
        %v768 = vunpack.c.l.b16 %v736
        %v769 = vunpack.c.l.b16 %v737
        %v770 = vunpack.c.l.b16 %v738
        %v771 = vunpack.c.l.b16 %v739
        %v772 = vpack.c.b16 %v757, %v756
        %v773 = vpack.c.b16 %v759, %v758
        %v774 = vpack.c.b16 %v761, %v760
        %v775 = vpack.c.b16 %v763, %v762
        %v776 = vpack.c.b16 %v765, %v764
        %v777 = vpack.c.b16 %v767, %v766
        %v778 = vpack.c.b16 %v769, %v768
        %v779 = vpack.c.b16 %v771, %v770
        %788 = vmatprep.subr.bf16.mxu0 0
        %789 = vmatpush1.bf16.msra.mxu0 %v772
        %790 = vmatprep.subr.bf16.mxu0 0
        %791 = vmatpush1.bf16.msra.mxu0 %v773
        %792 = vmatprep.subr.bf16.mxu0 0
        %793 = vmatpush1.bf16.msra.mxu0 %v774
        %794 = vmatprep.subr.bf16.mxu0 0
        %795 = vmatpush1.bf16.msra.mxu0 %v775
        %796 = vmatprep.subr.bf16.mxu0 0
        %797 = vmatpush1.bf16.msra.mxu0 %v776
        %798 = vmatprep.subr.bf16.mxu0 0
        %799 = vmatpush1.bf16.msra.mxu0 %v777
        %800 = vmatprep.subr.bf16.mxu0 0
        %801 = vmatpush1.bf16.msra.mxu0 %v778
        %802 = vmatprep.subr.bf16.mxu0 0
        %803 = vmatpush1.bf16.msra.mxu0 %v779
        %804 = vmatprep.subr.bf16.mxu0 0
        %805 = vmatpush1.bf16.msra.mxu0 0
        %806 = vmatprep.subr.bf16.mxu0 0
        %807 = vmatpush1.bf16.msra.mxu0 0
        %808 = vmatprep.subr.bf16.mxu0 0
        %809 = vmatpush1.bf16.msra.mxu0 0
        %810 = vmatprep.subr.bf16.mxu0 0
        %811 = vmatpush1.bf16.msra.mxu0 0
        %812 = vmatprep.subr.bf16.mxu0 0
        %813 = vmatpush1.bf16.msra.mxu0 0
        %814 = vmatprep.subr.bf16.mxu0 0
        %815 = vmatpush1.bf16.msra.mxu0 0
        %816 = vmatprep.subr.bf16.mxu0 0
        %817 = vmatpush1.bf16.msra.mxu0 0
        %818 = vmatprep.subr.bf16.mxu0 0
        %819 = vmatpush1.bf16.msra.mxu0 0
        %820 = vmatprep.mubr.bf16.mxu0 0
        %821 = vmatmul.mubr.bf16.gmra.mrb[0].mxu0 %v716
        %v822 = vpop.f32.mrb[0].mxu0
        %v823 = vadd.f32 0.0, %v822
        %v824 = vpop.f32.mrb[0].mxu0
        %v825 = vpop.f32.mrb[0].mxu0
        %v826 = vadd.f32 0.0, %v825
        %v827 = vpop.f32.mrb[0].mxu0
        %828 = vmatprep.mubr.bf16.mxu0 0
        %829 = vmatmul.mubr.bf16.gmra.mrb[0].mxu0 %v717
        %v830 = vpop.f32.mrb[0].mxu0
        %v831 = vadd.f32 0.0, %v830
        %v832 = vpop.f32.mrb[0].mxu0
        %v833 = vpop.f32.mrb[0].mxu0
        %v834 = vadd.f32 0.0, %v833
        %v835 = vpop.f32.mrb[0].mxu0
        %836 = vmatprep.mubr.bf16.mxu0 0
        %837 = vmatmul.mubr.bf16.gmra.mrb[0].mxu0 %v718
        %v838 = vpop.f32.mrb[0].mxu0
        %v839 = vadd.f32 0.0, %v838
        %v840 = vpop.f32.mrb[0].mxu0
        %v841 = vpop.f32.mrb[0].mxu0
        %v842 = vadd.f32 0.0, %v841
        %v843 = vpop.f32.mrb[0].mxu0
        %844 = vmatprep.mubr.bf16.mxu0 0
        %845 = vmatmul.mubr.bf16.gmra.mrb[0].mxu0 %v719
        %v846 = vpop.f32.mrb[0].mxu0
        %v847 = vadd.f32 0.0, %v846
        %v848 = vpop.f32.mrb[0].mxu0
        %v849 = vpop.f32.mrb[0].mxu0
        %v850 = vadd.f32 0.0, %v849
        %v851 = vpop.f32.mrb[0].mxu0
        %852 = vmatprep.mubr.bf16.mxu0 0
        %853 = vmatmul.mubr.bf16.gmra.mrb[0].mxu0 %v720
        %v854 = vpop.f32.mrb[0].mxu0
        %v855 = vadd.f32 0.0, %v854
        %v856 = vpop.f32.mrb[0].mxu0
        %v857 = vpop.f32.mrb[0].mxu0
        %v858 = vadd.f32 0.0, %v857
        %v859 = vpop.f32.mrb[0].mxu0
        %860 = vmatprep.mubr.bf16.mxu0 0
        %861 = vmatmul.mubr.bf16.gmra.mrb[0].mxu0 %v721
        %v862 = vpop.f32.mrb[0].mxu0
        %v863 = vadd.f32 0.0, %v862
        %v864 = vpop.f32.mrb[0].mxu0
        %v865 = vpop.f32.mrb[0].mxu0
        %v866 = vadd.f32 0.0, %v865
        %v867 = vpop.f32.mrb[0].mxu0
        %868 = vmatprep.mubr.bf16.mxu0 0
        %869 = vmatmul.mubr.bf16.gmra.mrb[0].mxu0 %v722
        %v870 = vpop.f32.mrb[0].mxu0
        %v871 = vadd.f32 0.0, %v870
        %v872 = vpop.f32.mrb[0].mxu0
        %v873 = vpop.f32.mrb[0].mxu0
        %v874 = vadd.f32 0.0, %v873
        %v875 = vpop.f32.mrb[0].mxu0
        %876 = vmatprep.mubr.bf16.mxu0 0
        %877 = vmatmul.mubr.bf16.gmra.mrb[0].mxu0 %v723
        %v878 = vpop.f32.mrb[0].mxu0
        %v879 = vadd.f32 0.0, %v878
        %v880 = vpop.f32.mrb[0].mxu0
        %v881 = vpop.f32.mrb[0].mxu0
        %v882 = vadd.f32 0.0, %v881
        %v883 = vpop.f32.mrb[0].mxu0
        %884 = vdwg.mxu0
        %v901 = vunpack.c.l.b16 %v700
        %v902 = vunpack.c.l.b16 %v701
        %v903 = vunpack.c.l.b16 %v702
        %v904 = vunpack.c.l.b16 %v703
        %v905 = vunpack.c.l.b16 %v704
        %v906 = vunpack.c.l.b16 %v705
        %v907 = vunpack.c.l.b16 %v706
        %v908 = vunpack.c.l.b16 %v707
        %v909 = vunpack.c.l.b16 %v708
        %v910 = vunpack.c.l.b16 %v709
        %v911 = vunpack.c.l.b16 %v710
        %v912 = vunpack.c.l.b16 %v711
        %v913 = vunpack.c.l.b16 %v712
        %v914 = vunpack.c.l.b16 %v713
        %v915 = vunpack.c.l.b16 %v714
        %v916 = vunpack.c.l.b16 %v715
        %v917 = vpack.c.b16 %v902, %v901
        %v918 = vpack.c.b16 %v904, %v903
        %v919 = vpack.c.b16 %v906, %v905
        %v920 = vpack.c.b16 %v908, %v907
        %v921 = vpack.c.b16 %v910, %v909
        %v922 = vpack.c.b16 %v912, %v911
        %v923 = vpack.c.b16 %v914, %v913
        %v924 = vpack.c.b16 %v916, %v915
        %933 = vmatprep.subr.bf16.mxu0 0
        %934 = vmatpush1.bf16.msra.mxu0 %v917
        %935 = vmatprep.subr.bf16.mxu0 0
        %936 = vmatpush1.bf16.msra.mxu0 %v918
        %937 = vmatprep.subr.bf16.mxu0 0
        %938 = vmatpush1.bf16.msra.mxu0 %v919
        %939 = vmatprep.subr.bf16.mxu0 0
        %940 = vmatpush1.bf16.msra.mxu0 %v920
        %941 = vmatprep.subr.bf16.mxu0 0
        %942 = vmatpush1.bf16.msra.mxu0 %v921
        %943 = vmatprep.subr.bf16.mxu0 0
        %944 = vmatpush1.bf16.msra.mxu0 %v922
        %945 = vmatprep.subr.bf16.mxu0 0
        %946 = vmatpush1.bf16.msra.mxu0 %v923
        %947 = vmatprep.subr.bf16.mxu0 0
        %948 = vmatpush1.bf16.msra.mxu0 %v924
        %949 = vmatprep.subr.bf16.mxu0 0
        %950 = vmatpush1.bf16.msra.mxu0 0
        %951 = vmatprep.subr.bf16.mxu0 0
        %952 = vmatpush1.bf16.msra.mxu0 0
        %953 = vmatprep.subr.bf16.mxu0 0
        %954 = vmatpush1.bf16.msra.mxu0 0
        %955 = vmatprep.subr.bf16.mxu0 0
        %956 = vmatpush1.bf16.msra.mxu0 0
        %957 = vmatprep.subr.bf16.mxu0 0
        %958 = vmatpush1.bf16.msra.mxu0 0
        %959 = vmatprep.subr.bf16.mxu0 0
        %960 = vmatpush1.bf16.msra.mxu0 0
        %961 = vmatprep.subr.bf16.mxu0 0
        %962 = vmatpush1.bf16.msra.mxu0 0
        %963 = vmatprep.subr.bf16.mxu0 0
        %964 = vmatpush1.bf16.msra.mxu0 0
        %965 = vmatprep.mubr.bf16.mxu0 0
        %966 = vmatmul.mubr.bf16.gmra.mrb[0].mxu0 %v692
        %v967 = vpop.f32.mrb[0].mxu0
        %v968 = vadd.f32 %v823, %v967
        %v969 = vpop.f32.mrb[0].mxu0
        %v970 = vpop.f32.mrb[0].mxu0
        %v971 = vadd.f32 %v826, %v970
        %v972 = vpop.f32.mrb[0].mxu0
        %973 = vmatprep.mubr.bf16.mxu0 0
        %974 = vmatmul.mubr.bf16.gmra.mrb[0].mxu0 %v693
        %v975 = vpop.f32.mrb[0].mxu0
        %v976 = vadd.f32 %v831, %v975
        %v977 = vpop.f32.mrb[0].mxu0
        %v978 = vpop.f32.mrb[0].mxu0
        %v979 = vadd.f32 %v834, %v978
        %v980 = vpop.f32.mrb[0].mxu0
        %981 = vmatprep.mubr.bf16.mxu0 0
        %982 = vmatmul.mubr.bf16.gmra.mrb[0].mxu0 %v694
        %v983 = vpop.f32.mrb[0].mxu0
        %v984 = vadd.f32 %v839, %v983
        %v985 = vpop.f32.mrb[0].mxu0
        %v986 = vpop.f32.mrb[0].mxu0
        %v987 = vadd.f32 %v842, %v986
        %v988 = vpop.f32.mrb[0].mxu0
        %989 = vmatprep.mubr.bf16.mxu0 0
        %990 = vmatmul.mubr.bf16.gmra.mrb[0].mxu0 %v695
        %v991 = vpop.f32.mrb[0].mxu0
        %v992 = vadd.f32 %v847, %v991
        %v993 = vpop.f32.mrb[0].mxu0
        %v994 = vpop.f32.mrb[0].mxu0
        %v995 = vadd.f32 %v850, %v994
        %v996 = vpop.f32.mrb[0].mxu0
        %997 = vmatprep.mubr.bf16.mxu0 0
        %998 = vmatmul.mubr.bf16.gmra.mrb[0].mxu0 %v696
        %v999 = vpop.f32.mrb[0].mxu0
        %v1000 = vadd.f32 %v855, %v999
        %v1001 = vpop.f32.mrb[0].mxu0
        %v1002 = vpop.f32.mrb[0].mxu0
        %v1003 = vadd.f32 %v858, %v1002
        %v1004 = vpop.f32.mrb[0].mxu0
        %1005 = vmatprep.mubr.bf16.mxu0 0
        %1006 = vmatmul.mubr.bf16.gmra.mrb[0].mxu0 %v697
        %v1007 = vpop.f32.mrb[0].mxu0
        %v1008 = vadd.f32 %v863, %v1007
        %v1009 = vpop.f32.mrb[0].mxu0
        %v1010 = vpop.f32.mrb[0].mxu0
        %v1011 = vadd.f32 %v866, %v1010
        %v1012 = vpop.f32.mrb[0].mxu0
        %1013 = vmatprep.mubr.bf16.mxu0 0
        %1014 = vmatmul.mubr.bf16.gmra.mrb[0].mxu0 %v698
        %v1015 = vpop.f32.mrb[0].mxu0
        %v1016 = vadd.f32 %v871, %v1015
        %v1017 = vpop.f32.mrb[0].mxu0
        %v1018 = vpop.f32.mrb[0].mxu0
        %v1019 = vadd.f32 %v874, %v1018
        %v1020 = vpop.f32.mrb[0].mxu0
        %1021 = vmatprep.mubr.bf16.mxu0 0
        %1022 = vmatmul.mubr.bf16.gmra.mrb[0].mxu0 %v699
        %v1023 = vpop.f32.mrb[0].mxu0
        %v1024 = vadd.f32 %v879, %v1023
        %v1025 = vpop.f32.mrb[0].mxu0
        %v1026 = vpop.f32.mrb[0].mxu0
        %v1027 = vadd.f32 %v882, %v1026
        %v1028 = vpop.f32.mrb[0].mxu0
        %1029 = vdwg.mxu0
        %v1030 = vpack.c.bf16 %v677, %v676
        %v1031 = vpack.c.bf16 %v679, %v678
        %v1032 = vpack.c.bf16 %v681, %v680
        %v1033 = vpack.c.bf16 %v683, %v682
        %v1034 = vpack.c.bf16 %v685, %v684
        %v1035 = vpack.c.bf16 %v687, %v686
        %v1036 = vpack.c.bf16 %v689, %v688
        %v1037 = vpack.c.bf16 %v691, %v690
        %v1038 = vld [vmem:[#allocation5 + $0x80] sm:$0xf]
        %v1039 = vld [vmem:[#allocation5 + $0x84] sm:$0xf]
        %v1040 = vld [vmem:[#allocation5 + $0x88] sm:$0xf]
        %v1041 = vld [vmem:[#allocation5 + $0x8c] sm:$0xf]
        %v1042 = vld [vmem:[#allocation5 + $0x90] sm:$0xf]
        %v1043 = vld [vmem:[#allocation5 + $0x94] sm:$0xf]
        %v1044 = vld [vmem:[#allocation5 + $0x98] sm:$0xf]
        %v1045 = vld [vmem:[#allocation5 + $0x9c] sm:$0xf]
        %v1046 = vld [vmem:[#allocation5 + $0xa0] sm:$0xf]
        %v1047 = vld [vmem:[#allocation5 + $0xa4] sm:$0xf]
        %v1048 = vld [vmem:[#allocation5 + $0xa8] sm:$0xf]
        %v1049 = vld [vmem:[#allocation5 + $0xac] sm:$0xf]
        %v1050 = vld [vmem:[#allocation5 + $0xb0] sm:$0xf]
        %v1051 = vld [vmem:[#allocation5 + $0xb4] sm:$0xf]
        %v1052 = vld [vmem:[#allocation5 + $0xb8] sm:$0xf]
        %v1053 = vld [vmem:[#allocation5 + $0xbc] sm:$0xf]
        %v1070 = vunpack.c.l.b16 %v1038
        %v1071 = vunpack.c.l.b16 %v1039
        %v1072 = vunpack.c.l.b16 %v1040
        %v1073 = vunpack.c.l.b16 %v1041
        %v1074 = vunpack.c.l.b16 %v1042
        %v1075 = vunpack.c.l.b16 %v1043
        %v1076 = vunpack.c.l.b16 %v1044
        %v1077 = vunpack.c.l.b16 %v1045
        %v1078 = vunpack.c.l.b16 %v1046
        %v1079 = vunpack.c.l.b16 %v1047
        %v1080 = vunpack.c.l.b16 %v1048
        %v1081 = vunpack.c.l.b16 %v1049
        %v1082 = vunpack.c.l.b16 %v1050
        %v1083 = vunpack.c.l.b16 %v1051
        %v1084 = vunpack.c.l.b16 %v1052
        %v1085 = vunpack.c.l.b16 %v1053
        %v1086 = vpack.c.b16 %v1071, %v1070
        %v1087 = vpack.c.b16 %v1073, %v1072
        %v1088 = vpack.c.b16 %v1075, %v1074
        %v1089 = vpack.c.b16 %v1077, %v1076
        %v1090 = vpack.c.b16 %v1079, %v1078
        %v1091 = vpack.c.b16 %v1081, %v1080
        %v1092 = vpack.c.b16 %v1083, %v1082
        %v1093 = vpack.c.b16 %v1085, %v1084
        %1102 = vmatprep.subr.bf16.mxu0 0
        %1103 = vmatpush1.bf16.msra.mxu0 %v1086
        %1104 = vmatprep.subr.bf16.mxu0 0
        %1105 = vmatpush1.bf16.msra.mxu0 %v1087
        %1106 = vmatprep.subr.bf16.mxu0 0
        %1107 = vmatpush1.bf16.msra.mxu0 %v1088
        %1108 = vmatprep.subr.bf16.mxu0 0
        %1109 = vmatpush1.bf16.msra.mxu0 %v1089
        %1110 = vmatprep.subr.bf16.mxu0 0
        %1111 = vmatpush1.bf16.msra.mxu0 %v1090
        %1112 = vmatprep.subr.bf16.mxu0 0
        %1113 = vmatpush1.bf16.msra.mxu0 %v1091
        %1114 = vmatprep.subr.bf16.mxu0 0
        %1115 = vmatpush1.bf16.msra.mxu0 %v1092
        %1116 = vmatprep.subr.bf16.mxu0 0
        %1117 = vmatpush1.bf16.msra.mxu0 %v1093
        %1118 = vmatprep.subr.bf16.mxu0 0
        %1119 = vmatpush1.bf16.msra.mxu0 0
        %1120 = vmatprep.subr.bf16.mxu0 0
        %1121 = vmatpush1.bf16.msra.mxu0 0
        %1122 = vmatprep.subr.bf16.mxu0 0
        %1123 = vmatpush1.bf16.msra.mxu0 0
        %1124 = vmatprep.subr.bf16.mxu0 0
        %1125 = vmatpush1.bf16.msra.mxu0 0
        %1126 = vmatprep.subr.bf16.mxu0 0
        %1127 = vmatpush1.bf16.msra.mxu0 0
        %1128 = vmatprep.subr.bf16.mxu0 0
        %1129 = vmatpush1.bf16.msra.mxu0 0
        %1130 = vmatprep.subr.bf16.mxu0 0
        %1131 = vmatpush1.bf16.msra.mxu0 0
        %1132 = vmatprep.subr.bf16.mxu0 0
        %1133 = vmatpush1.bf16.msra.mxu0 0
        %1134 = vmatprep.mubr.bf16.mxu0 0
        %1135 = vmatmul.mubr.bf16.gmra.mrb[0].mxu0 %v1030
        %v1136 = vpop.f32.mrb[0].mxu0
        %v1137 = vadd.f32 0.0, %v1136
        %v1138 = vpop.f32.mrb[0].mxu0
        %v1139 = vpop.f32.mrb[0].mxu0
        %v1140 = vadd.f32 0.0, %v1139
        %v1141 = vpop.f32.mrb[0].mxu0
        %1142 = vmatprep.mubr.bf16.mxu0 0
        %1143 = vmatmul.mubr.bf16.gmra.mrb[0].mxu0 %v1031
        %v1144 = vpop.f32.mrb[0].mxu0
        %v1145 = vadd.f32 0.0, %v1144
        %v1146 = vpop.f32.mrb[0].mxu0
        %v1147 = vpop.f32.mrb[0].mxu0
        %v1148 = vadd.f32 0.0, %v1147
        %v1149 = vpop.f32.mrb[0].mxu0
        %1150 = vmatprep.mubr.bf16.mxu0 0
        %1151 = vmatmul.mubr.bf16.gmra.mrb[0].mxu0 %v1032
        %v1152 = vpop.f32.mrb[0].mxu0
        %v1153 = vadd.f32 0.0, %v1152
        %v1154 = vpop.f32.mrb[0].mxu0
        %v1155 = vpop.f32.mrb[0].mxu0
        %v1156 = vadd.f32 0.0, %v1155
        %v1157 = vpop.f32.mrb[0].mxu0
        %1158 = vmatprep.mubr.bf16.mxu0 0
        %1159 = vmatmul.mubr.bf16.gmra.mrb[0].mxu0 %v1033
        %v1160 = vpop.f32.mrb[0].mxu0
        %v1161 = vadd.f32 0.0, %v1160
        %v1162 = vpop.f32.mrb[0].mxu0
        %v1163 = vpop.f32.mrb[0].mxu0
        %v1164 = vadd.f32 0.0, %v1163
        %v1165 = vpop.f32.mrb[0].mxu0
        %1166 = vmatprep.mubr.bf16.mxu0 0
        %1167 = vmatmul.mubr.bf16.gmra.mrb[0].mxu0 %v1034
        %v1168 = vpop.f32.mrb[0].mxu0
        %v1169 = vadd.f32 0.0, %v1168
        %v1170 = vpop.f32.mrb[0].mxu0
        %v1171 = vpop.f32.mrb[0].mxu0
        %v1172 = vadd.f32 0.0, %v1171
        %v1173 = vpop.f32.mrb[0].mxu0
        %1174 = vmatprep.mubr.bf16.mxu0 0
        %1175 = vmatmul.mubr.bf16.gmra.mrb[0].mxu0 %v1035
        %v1176 = vpop.f32.mrb[0].mxu0
        %v1177 = vadd.f32 0.0, %v1176
        %v1178 = vpop.f32.mrb[0].mxu0
        %v1179 = vpop.f32.mrb[0].mxu0
        %v1180 = vadd.f32 0.0, %v1179
        %v1181 = vpop.f32.mrb[0].mxu0
        %1182 = vmatprep.mubr.bf16.mxu0 0
        %1183 = vmatmul.mubr.bf16.gmra.mrb[0].mxu0 %v1036
        %v1184 = vpop.f32.mrb[0].mxu0
        %v1185 = vadd.f32 0.0, %v1184
        %v1186 = vpop.f32.mrb[0].mxu0
        %v1187 = vpop.f32.mrb[0].mxu0
        %v1188 = vadd.f32 0.0, %v1187
        %v1189 = vpop.f32.mrb[0].mxu0
        %1190 = vmatprep.mubr.bf16.mxu0 0
        %1191 = vmatmul.mubr.bf16.gmra.mrb[0].mxu0 %v1037
        %v1192 = vpop.f32.mrb[0].mxu0
        %v1193 = vadd.f32 0.0, %v1192
        %v1194 = vpop.f32.mrb[0].mxu0
        %v1195 = vpop.f32.mrb[0].mxu0
        %v1196 = vadd.f32 0.0, %v1195
        %v1197 = vpop.f32.mrb[0].mxu0
        %1198 = vdwg.mxu0
        %v1199 = vadd.f32 %v968, %v1137
        %v1200 = vadd.f32 %v971, %v1140
        %v1201 = vadd.f32 %v976, %v1145
        %v1202 = vadd.f32 %v979, %v1148
        %v1203 = vadd.f32 %v984, %v1153
        %v1204 = vadd.f32 %v987, %v1156
        %v1205 = vadd.f32 %v992, %v1161
        %v1206 = vadd.f32 %v995, %v1164
        %v1207 = vadd.f32 %v1000, %v1169
        %v1208 = vadd.f32 %v1003, %v1172
        %v1209 = vadd.f32 %v1008, %v1177
        %v1210 = vadd.f32 %v1011, %v1180
        %v1211 = vadd.f32 %v1016, %v1185
        %v1212 = vadd.f32 %v1019, %v1188
        %v1213 = vadd.f32 %v1024, %v1193
        %v1214 = vadd.f32 %v1027, %v1196
        %v1215 = vld [vmem:[%s3] sm:$0x1]
        %v1217 = vlaneseq
        %v1218 = vshrl.u32 %v1217, 7
        %v1219 = vsub.s32 0, %v1218
        %v1220 = vrot.slane %v1215, %v1219
        %v1222 = vadd.f32 %v1199, %v1220
        %v1223 = vadd.f32 %v1200, %v1220
        %v1224 = vadd.f32 %v1201, %v1220
        %v1225 = vadd.f32 %v1202, %v1220
        %v1226 = vadd.f32 %v1203, %v1220
        %v1227 = vadd.f32 %v1204, %v1220
        %v1228 = vadd.f32 %v1205, %v1220
        %v1229 = vadd.f32 %v1206, %v1220
        %v1230 = vadd.f32 %v1207, %v1220
        %v1231 = vadd.f32 %v1208, %v1220
        %v1232 = vadd.f32 %v1209, %v1220
        %v1233 = vadd.f32 %v1210, %v1220
        %v1234 = vadd.f32 %v1211, %v1220
        %v1235 = vadd.f32 %v1212, %v1220
        %v1236 = vadd.f32 %v1213, %v1220
        %v1237 = vadd.f32 %v1214, %v1220
        %v1238 = vmax.f32 %v1222, 0.0
        %v1239 = vmax.f32 %v1223, 0.0
        %v1240 = vmax.f32 %v1224, 0.0
        %v1241 = vmax.f32 %v1225, 0.0
        %v1242 = vmax.f32 %v1226, 0.0
        %v1243 = vmax.f32 %v1227, 0.0
        %v1244 = vmax.f32 %v1228, 0.0
        %v1245 = vmax.f32 %v1229, 0.0
        %v1246 = vmax.f32 %v1230, 0.0
        %v1247 = vmax.f32 %v1231, 0.0
        %v1248 = vmax.f32 %v1232, 0.0
        %v1249 = vmax.f32 %v1233, 0.0
        %v1250 = vmax.f32 %v1234, 0.0
        %v1251 = vmax.f32 %v1235, 0.0
        %v1252 = vmax.f32 %v1236, 0.0
        %v1253 = vmax.f32 %v1237, 0.0
        %v1254 = vrot.slane %v1238, 7
        %v1255 = vrot.slane %v1239, 7
        %v1256 = vrot.slane %v1240, 7
        %v1257 = vrot.slane %v1241, 7
        %v1258 = vrot.slane %v1242, 7
        %v1259 = vrot.slane %v1243, 7
        %v1260 = vrot.slane %v1244, 7
        %v1261 = vrot.slane %v1245, 7
        %v1262 = vrot.slane %v1246, 7
        %v1263 = vrot.slane %v1247, 7
        %v1264 = vrot.slane %v1248, 7
        %v1265 = vrot.slane %v1249, 7
        %v1266 = vrot.slane %v1250, 7
        %v1267 = vrot.slane %v1251, 7
        %v1268 = vrot.slane %v1252, 7
        %v1269 = vrot.slane %v1253, 7
        %v1270 = vsel %vm546, %v1268, %v1269
        %v1271 = vsel %vm546, %v1267, %v1268
        %v1272 = vsel %vm546, %v1266, %v1267
        %v1273 = vsel %vm546, %v1265, %v1266
        %v1274 = vsel %vm546, %v1264, %v1265
        %v1275 = vsel %vm546, %v1263, %v1264
        %v1276 = vsel %vm546, %v1262, %v1263
        %v1277 = vsel %vm546, %v1261, %v1262
        %v1278 = vsel %vm546, %v1260, %v1261
        %v1279 = vsel %vm546, %v1259, %v1260
        %v1280 = vsel %vm546, %v1258, %v1259
        %v1281 = vsel %vm546, %v1257, %v1258
        %v1282 = vsel %vm546, %v1256, %v1257
        %v1283 = vsel %vm546, %v1255, %v1256
        %v1284 = vsel %vm546, %v1254, %v1255
        %v1285 = vsel %vm546, %v1269, %v1254
        %v1286 = vsel %vm579, %v1285, 0.0
        %v1287 = vsel %vm580, %v1284, 0.0
        %v1288 = vsel %vm581, %v1283, 0.0
        %v1289 = vsel %vm582, %v1282, 0.0
        %v1290 = vsel %vm583, %v1281, 0.0
        %v1291 = vsel %vm584, %v1280, 0.0
        %v1292 = vsel %vm585, %v1279, 0.0
        %v1293 = vsel %vm586, %v1278, 0.0
        %v1294 = vsel %vm587, %v1277, 0.0
        %v1295 = vsel %vm588, %v1276, 0.0
        %v1296 = vsel %vm589, %v1275, 0.0
        %v1297 = vsel %vm590, %v1274, 0.0
        %v1298 = vsel %vm591, %v1273, 0.0
        %v1299 = vsel %vm592, %v1272, 0.0
        %v1300 = vsel %vm593, %v1271, 0.0
        %v1301 = vsel %vm594, %v1270, 0.0
        %v1302 = vrot.slane %v1238, 1
        %v1303 = vrot.slane %v1239, 1
        %v1304 = vrot.slane %v1240, 1
        %v1305 = vrot.slane %v1241, 1
        %v1306 = vrot.slane %v1242, 1
        %v1307 = vrot.slane %v1243, 1
        %v1308 = vrot.slane %v1244, 1
        %v1309 = vrot.slane %v1245, 1
        %v1310 = vrot.slane %v1246, 1
        %v1311 = vrot.slane %v1247, 1
        %v1312 = vrot.slane %v1248, 1
        %v1313 = vrot.slane %v1249, 1
        %v1314 = vrot.slane %v1250, 1
        %v1315 = vrot.slane %v1251, 1
        %v1316 = vrot.slane %v1252, 1
        %v1317 = vrot.slane %v1253, 1
        %v1318 = vsel %vm627, %v1316, %v1317
        %v1319 = vsel %vm627, %v1315, %v1316
        %v1320 = vsel %vm627, %v1314, %v1315
        %v1321 = vsel %vm627, %v1313, %v1314
        %v1322 = vsel %vm627, %v1312, %v1313
        %v1323 = vsel %vm627, %v1311, %v1312
        %v1324 = vsel %vm627, %v1310, %v1311
        %v1325 = vsel %vm627, %v1309, %v1310
        %v1326 = vsel %vm627, %v1308, %v1309
        %v1327 = vsel %vm627, %v1307, %v1308
        %v1328 = vsel %vm627, %v1306, %v1307
        %v1329 = vsel %vm627, %v1305, %v1306
        %v1330 = vsel %vm627, %v1304, %v1305
        %v1331 = vsel %vm627, %v1303, %v1304
        %v1332 = vsel %vm627, %v1302, %v1303
        %v1333 = vsel %vm627, %v1317, %v1302
        %v1334 = vsel %vm660, %v1332, 0.0
        %v1335 = vsel %vm661, %v1331, 0.0
        %v1336 = vsel %vm662, %v1330, 0.0
        %v1337 = vsel %vm663, %v1329, 0.0
        %v1338 = vsel %vm664, %v1328, 0.0
        %v1339 = vsel %vm665, %v1327, 0.0
        %v1340 = vsel %vm666, %v1326, 0.0
        %v1341 = vsel %vm667, %v1325, 0.0
        %v1342 = vsel %vm668, %v1324, 0.0
        %v1343 = vsel %vm669, %v1323, 0.0
        %v1344 = vsel %vm670, %v1322, 0.0
        %v1345 = vsel %vm671, %v1321, 0.0
        %v1346 = vsel %vm672, %v1320, 0.0
        %v1347 = vsel %vm673, %v1319, 0.0
        %v1348 = vsel %vm674, %v1318, 0.0
        %v1349 = vsel %vm675, %v1333, 0.0
        %v1350 = vpack.c.bf16 %v1287, %v1286
        %v1351 = vpack.c.bf16 %v1289, %v1288
        %v1352 = vpack.c.bf16 %v1291, %v1290
        %v1353 = vpack.c.bf16 %v1293, %v1292
        %v1354 = vpack.c.bf16 %v1295, %v1294
        %v1355 = vpack.c.bf16 %v1297, %v1296
        %v1356 = vpack.c.bf16 %v1299, %v1298
        %v1357 = vpack.c.bf16 %v1301, %v1300
        %v1358 = vld [vmem:[#allocation7] sm:$0xf]
        %v1359 = vld [vmem:[#allocation7 + $0x4] sm:$0xf]
        %v1360 = vld [vmem:[#allocation7 + $0x8] sm:$0xf]
        %v1361 = vld [vmem:[#allocation7 + $0xc] sm:$0xf]
        %v1362 = vld [vmem:[#allocation7 + $0x10] sm:$0xf]
        %v1363 = vld [vmem:[#allocation7 + $0x14] sm:$0xf]
        %v1364 = vld [vmem:[#allocation7 + $0x18] sm:$0xf]
        %v1365 = vld [vmem:[#allocation7 + $0x1c] sm:$0xf]
        %v1366 = vld [vmem:[#allocation7 + $0x20] sm:$0xf]
        %v1367 = vld [vmem:[#allocation7 + $0x24] sm:$0xf]
        %v1368 = vld [vmem:[#allocation7 + $0x28] sm:$0xf]
        %v1369 = vld [vmem:[#allocation7 + $0x2c] sm:$0xf]
        %v1370 = vld [vmem:[#allocation7 + $0x30] sm:$0xf]
        %v1371 = vld [vmem:[#allocation7 + $0x34] sm:$0xf]
        %v1372 = vld [vmem:[#allocation7 + $0x38] sm:$0xf]
        %v1373 = vld [vmem:[#allocation7 + $0x3c] sm:$0xf]
        %v1374 = vpack.c.bf16 %v1239, %v1238
        %v1375 = vpack.c.bf16 %v1241, %v1240
        %v1376 = vpack.c.bf16 %v1243, %v1242
        %v1377 = vpack.c.bf16 %v1245, %v1244
        %v1378 = vpack.c.bf16 %v1247, %v1246
        %v1379 = vpack.c.bf16 %v1249, %v1248
        %v1380 = vpack.c.bf16 %v1251, %v1250
        %v1381 = vpack.c.bf16 %v1253, %v1252
        %v1382 = vld [vmem:[#allocation7 + $0x40] sm:$0xf]
        %v1383 = vld [vmem:[#allocation7 + $0x44] sm:$0xf]
        %v1384 = vld [vmem:[#allocation7 + $0x48] sm:$0xf]
        %v1385 = vld [vmem:[#allocation7 + $0x4c] sm:$0xf]
        %v1386 = vld [vmem:[#allocation7 + $0x50] sm:$0xf]
        %v1387 = vld [vmem:[#allocation7 + $0x54] sm:$0xf]
        %v1388 = vld [vmem:[#allocation7 + $0x58] sm:$0xf]
        %v1389 = vld [vmem:[#allocation7 + $0x5c] sm:$0xf]
        %v1390 = vld [vmem:[#allocation7 + $0x60] sm:$0xf]
        %v1391 = vld [vmem:[#allocation7 + $0x64] sm:$0xf]
        %v1392 = vld [vmem:[#allocation7 + $0x68] sm:$0xf]
        %v1393 = vld [vmem:[#allocation7 + $0x6c] sm:$0xf]
        %v1394 = vld [vmem:[#allocation7 + $0x70] sm:$0xf]
        %v1395 = vld [vmem:[#allocation7 + $0x74] sm:$0xf]
        %v1396 = vld [vmem:[#allocation7 + $0x78] sm:$0xf]
        %v1397 = vld [vmem:[#allocation7 + $0x7c] sm:$0xf]
        %v1414 = vunpack.c.l.b16 %v1382
        %v1415 = vunpack.c.l.b16 %v1383
        %v1416 = vunpack.c.l.b16 %v1384
        %v1417 = vunpack.c.l.b16 %v1385
        %v1418 = vunpack.c.l.b16 %v1386
        %v1419 = vunpack.c.l.b16 %v1387
        %v1420 = vunpack.c.l.b16 %v1388
        %v1421 = vunpack.c.l.b16 %v1389
        %v1422 = vunpack.c.l.b16 %v1390
        %v1423 = vunpack.c.l.b16 %v1391
        %v1424 = vunpack.c.l.b16 %v1392
        %v1425 = vunpack.c.l.b16 %v1393
        %v1426 = vunpack.c.l.b16 %v1394
        %v1427 = vunpack.c.l.b16 %v1395
        %v1428 = vunpack.c.l.b16 %v1396
        %v1429 = vunpack.c.l.b16 %v1397
        %v1430 = vpack.c.b16 %v1415, %v1414
        %v1431 = vpack.c.b16 %v1417, %v1416
        %v1432 = vpack.c.b16 %v1419, %v1418
        %v1433 = vpack.c.b16 %v1421, %v1420
        %v1434 = vpack.c.b16 %v1423, %v1422
        %v1435 = vpack.c.b16 %v1425, %v1424
        %v1436 = vpack.c.b16 %v1427, %v1426
        %v1437 = vpack.c.b16 %v1429, %v1428
        %1446 = vmatprep.subr.bf16.mxu0 0
        %1447 = vmatpush1.bf16.msra.mxu0 %v1430
        %1448 = vmatprep.subr.bf16.mxu0 0
        %1449 = vmatpush1.bf16.msra.mxu0 %v1431
        %1450 = vmatprep.subr.bf16.mxu0 0
        %1451 = vmatpush1.bf16.msra.mxu0 %v1432
        %1452 = vmatprep.subr.bf16.mxu0 0
        %1453 = vmatpush1.bf16.msra.mxu0 %v1433
        %1454 = vmatprep.subr.bf16.mxu0 0
        %1455 = vmatpush1.bf16.msra.mxu0 %v1434
        %1456 = vmatprep.subr.bf16.mxu0 0
        %1457 = vmatpush1.bf16.msra.mxu0 %v1435
        %1458 = vmatprep.subr.bf16.mxu0 0
        %1459 = vmatpush1.bf16.msra.mxu0 %v1436
        %1460 = vmatprep.subr.bf16.mxu0 0
        %1461 = vmatpush1.bf16.msra.mxu0 %v1437
        %1462 = vmatprep.subr.bf16.mxu0 0
        %1463 = vmatpush1.bf16.msra.mxu0 0
        %1464 = vmatprep.subr.bf16.mxu0 0
        %1465 = vmatpush1.bf16.msra.mxu0 0
        %1466 = vmatprep.subr.bf16.mxu0 0
        %1467 = vmatpush1.bf16.msra.mxu0 0
        %1468 = vmatprep.subr.bf16.mxu0 0
        %1469 = vmatpush1.bf16.msra.mxu0 0
        %1470 = vmatprep.subr.bf16.mxu0 0
        %1471 = vmatpush1.bf16.msra.mxu0 0
        %1472 = vmatprep.subr.bf16.mxu0 0
        %1473 = vmatpush1.bf16.msra.mxu0 0
        %1474 = vmatprep.subr.bf16.mxu0 0
        %1475 = vmatpush1.bf16.msra.mxu0 0
        %1476 = vmatprep.subr.bf16.mxu0 0
        %1477 = vmatpush1.bf16.msra.mxu0 0
        %1478 = vmatprep.mubr.bf16.mxu0 0
        %1479 = vmatmul.mubr.bf16.gmra.mrb[0].mxu0 %v1374
        %v1480 = vpop.f32.mrb[0].mxu0
        %v1481 = vadd.f32 0.0, %v1480
        %v1482 = vpop.f32.mrb[0].mxu0
        %v1483 = vpop.f32.mrb[0].mxu0
        %v1484 = vadd.f32 0.0, %v1483
        %v1485 = vpop.f32.mrb[0].mxu0
        %1486 = vmatprep.mubr.bf16.mxu0 0
        %1487 = vmatmul.mubr.bf16.gmra.mrb[0].mxu0 %v1375
        %v1488 = vpop.f32.mrb[0].mxu0
        %v1489 = vadd.f32 0.0, %v1488
        %v1490 = vpop.f32.mrb[0].mxu0
        %v1491 = vpop.f32.mrb[0].mxu0
        %v1492 = vadd.f32 0.0, %v1491
        %v1493 = vpop.f32.mrb[0].mxu0
        %1494 = vmatprep.mubr.bf16.mxu0 0
        %1495 = vmatmul.mubr.bf16.gmra.mrb[0].mxu0 %v1376
        %v1496 = vpop.f32.mrb[0].mxu0
        %v1497 = vadd.f32 0.0, %v1496
        %v1498 = vpop.f32.mrb[0].mxu0
        %v1499 = vpop.f32.mrb[0].mxu0
        %v1500 = vadd.f32 0.0, %v1499
        %v1501 = vpop.f32.mrb[0].mxu0
        %1502 = vmatprep.mubr.bf16.mxu0 0
        %1503 = vmatmul.mubr.bf16.gmra.mrb[0].mxu0 %v1377
        %v1504 = vpop.f32.mrb[0].mxu0
        %v1505 = vadd.f32 0.0, %v1504
        %v1506 = vpop.f32.mrb[0].mxu0
        %v1507 = vpop.f32.mrb[0].mxu0
        %v1508 = vadd.f32 0.0, %v1507
        %v1509 = vpop.f32.mrb[0].mxu0
        %1510 = vmatprep.mubr.bf16.mxu0 0
        %1511 = vmatmul.mubr.bf16.gmra.mrb[0].mxu0 %v1378
        %v1512 = vpop.f32.mrb[0].mxu0
        %v1513 = vadd.f32 0.0, %v1512
        %v1514 = vpop.f32.mrb[0].mxu0
        %v1515 = vpop.f32.mrb[0].mxu0
        %v1516 = vadd.f32 0.0, %v1515
        %v1517 = vpop.f32.mrb[0].mxu0
        %1518 = vmatprep.mubr.bf16.mxu0 0
        %1519 = vmatmul.mubr.bf16.gmra.mrb[0].mxu0 %v1379
        %v1520 = vpop.f32.mrb[0].mxu0
        %v1521 = vadd.f32 0.0, %v1520
        %v1522 = vpop.f32.mrb[0].mxu0
        %v1523 = vpop.f32.mrb[0].mxu0
        %v1524 = vadd.f32 0.0, %v1523
        %v1525 = vpop.f32.mrb[0].mxu0
        %1526 = vmatprep.mubr.bf16.mxu0 0
        %1527 = vmatmul.mubr.bf16.gmra.mrb[0].mxu0 %v1380
        %v1528 = vpop.f32.mrb[0].mxu0
        %v1529 = vadd.f32 0.0, %v1528
        %v1530 = vpop.f32.mrb[0].mxu0
        %v1531 = vpop.f32.mrb[0].mxu0
        %v1532 = vadd.f32 0.0, %v1531
        %v1533 = vpop.f32.mrb[0].mxu0
        %1534 = vmatprep.mubr.bf16.mxu0 0
        %1535 = vmatmul.mubr.bf16.gmra.mrb[0].mxu0 %v1381
        %v1536 = vpop.f32.mrb[0].mxu0
        %v1537 = vadd.f32 0.0, %v1536
        %v1538 = vpop.f32.mrb[0].mxu0
        %v1539 = vpop.f32.mrb[0].mxu0
        %v1540 = vadd.f32 0.0, %v1539
        %v1541 = vpop.f32.mrb[0].mxu0
        %1542 = vdwg.mxu0
        %v1559 = vunpack.c.l.b16 %v1358
        %v1560 = vunpack.c.l.b16 %v1359
        %v1561 = vunpack.c.l.b16 %v1360
        %v1562 = vunpack.c.l.b16 %v1361
        %v1563 = vunpack.c.l.b16 %v1362
        %v1564 = vunpack.c.l.b16 %v1363
        %v1565 = vunpack.c.l.b16 %v1364
        %v1566 = vunpack.c.l.b16 %v1365
        %v1567 = vunpack.c.l.b16 %v1366
        %v1568 = vunpack.c.l.b16 %v1367
        %v1569 = vunpack.c.l.b16 %v1368
        %v1570 = vunpack.c.l.b16 %v1369
        %v1571 = vunpack.c.l.b16 %v1370
        %v1572 = vunpack.c.l.b16 %v1371
        %v1573 = vunpack.c.l.b16 %v1372
        %v1574 = vunpack.c.l.b16 %v1373
        %v1575 = vpack.c.b16 %v1560, %v1559
        %v1576 = vpack.c.b16 %v1562, %v1561
        %v1577 = vpack.c.b16 %v1564, %v1563
        %v1578 = vpack.c.b16 %v1566, %v1565
        %v1579 = vpack.c.b16 %v1568, %v1567
        %v1580 = vpack.c.b16 %v1570, %v1569
        %v1581 = vpack.c.b16 %v1572, %v1571
        %v1582 = vpack.c.b16 %v1574, %v1573
        %1591 = vmatprep.subr.bf16.mxu0 0
        %1592 = vmatpush1.bf16.msra.mxu0 %v1575
        %1593 = vmatprep.subr.bf16.mxu0 0
        %1594 = vmatpush1.bf16.msra.mxu0 %v1576
        %1595 = vmatprep.subr.bf16.mxu0 0
        %1596 = vmatpush1.bf16.msra.mxu0 %v1577
        %1597 = vmatprep.subr.bf16.mxu0 0
        %1598 = vmatpush1.bf16.msra.mxu0 %v1578
        %1599 = vmatprep.subr.bf16.mxu0 0
        %1600 = vmatpush1.bf16.msra.mxu0 %v1579
        %1601 = vmatprep.subr.bf16.mxu0 0
        %1602 = vmatpush1.bf16.msra.mxu0 %v1580
        %1603 = vmatprep.subr.bf16.mxu0 0
        %1604 = vmatpush1.bf16.msra.mxu0 %v1581
        %1605 = vmatprep.subr.bf16.mxu0 0
        %1606 = vmatpush1.bf16.msra.mxu0 %v1582
        %1607 = vmatprep.subr.bf16.mxu0 0
        %1608 = vmatpush1.bf16.msra.mxu0 0
        %1609 = vmatprep.subr.bf16.mxu0 0
        %1610 = vmatpush1.bf16.msra.mxu0 0
        %1611 = vmatprep.subr.bf16.mxu0 0
        %1612 = vmatpush1.bf16.msra.mxu0 0
        %1613 = vmatprep.subr.bf16.mxu0 0
        %1614 = vmatpush1.bf16.msra.mxu0 0
        %1615 = vmatprep.subr.bf16.mxu0 0
        %1616 = vmatpush1.bf16.msra.mxu0 0
        %1617 = vmatprep.subr.bf16.mxu0 0
        %1618 = vmatpush1.bf16.msra.mxu0 0
        %1619 = vmatprep.subr.bf16.mxu0 0
        %1620 = vmatpush1.bf16.msra.mxu0 0
        %1621 = vmatprep.subr.bf16.mxu0 0
        %1622 = vmatpush1.bf16.msra.mxu0 0
        %1623 = vmatprep.mubr.bf16.mxu0 0
        %1624 = vmatmul.mubr.bf16.gmra.mrb[0].mxu0 %v1350
        %v1625 = vpop.f32.mrb[0].mxu0
        %v1626 = vadd.f32 %v1481, %v1625
        %v1627 = vpop.f32.mrb[0].mxu0
        %v1628 = vpop.f32.mrb[0].mxu0
        %v1629 = vadd.f32 %v1484, %v1628
        %v1630 = vpop.f32.mrb[0].mxu0
        %1631 = vmatprep.mubr.bf16.mxu0 0
        %1632 = vmatmul.mubr.bf16.gmra.mrb[0].mxu0 %v1351
        %v1633 = vpop.f32.mrb[0].mxu0
        %v1634 = vadd.f32 %v1489, %v1633
        %v1635 = vpop.f32.mrb[0].mxu0
        %v1636 = vpop.f32.mrb[0].mxu0
        %v1637 = vadd.f32 %v1492, %v1636
        %v1638 = vpop.f32.mrb[0].mxu0
        %1639 = vmatprep.mubr.bf16.mxu0 0
        %1640 = vmatmul.mubr.bf16.gmra.mrb[0].mxu0 %v1352
        %v1641 = vpop.f32.mrb[0].mxu0
        %v1642 = vadd.f32 %v1497, %v1641
        %v1643 = vpop.f32.mrb[0].mxu0
        %v1644 = vpop.f32.mrb[0].mxu0
        %v1645 = vadd.f32 %v1500, %v1644
        %v1646 = vpop.f32.mrb[0].mxu0
        %1647 = vmatprep.mubr.bf16.mxu0 0
        %1648 = vmatmul.mubr.bf16.gmra.mrb[0].mxu0 %v1353
        %v1649 = vpop.f32.mrb[0].mxu0
        %v1650 = vadd.f32 %v1505, %v1649
        %v1651 = vpop.f32.mrb[0].mxu0
        %v1652 = vpop.f32.mrb[0].mxu0
        %v1653 = vadd.f32 %v1508, %v1652
        %v1654 = vpop.f32.mrb[0].mxu0
        %1655 = vmatprep.mubr.bf16.mxu0 0
        %1656 = vmatmul.mubr.bf16.gmra.mrb[0].mxu0 %v1354
        %v1657 = vpop.f32.mrb[0].mxu0
        %v1658 = vadd.f32 %v1513, %v1657
        %v1659 = vpop.f32.mrb[0].mxu0
        %v1660 = vpop.f32.mrb[0].mxu0
        %v1661 = vadd.f32 %v1516, %v1660
        %v1662 = vpop.f32.mrb[0].mxu0
        %1663 = vmatprep.mubr.bf16.mxu0 0
        %1664 = vmatmul.mubr.bf16.gmra.mrb[0].mxu0 %v1355
        %v1665 = vpop.f32.mrb[0].mxu0
        %v1666 = vadd.f32 %v1521, %v1665
        %v1667 = vpop.f32.mrb[0].mxu0
        %v1668 = vpop.f32.mrb[0].mxu0
        %v1669 = vadd.f32 %v1524, %v1668
        %v1670 = vpop.f32.mrb[0].mxu0
        %1671 = vmatprep.mubr.bf16.mxu0 0
        %1672 = vmatmul.mubr.bf16.gmra.mrb[0].mxu0 %v1356
        %v1673 = vpop.f32.mrb[0].mxu0
        %v1674 = vadd.f32 %v1529, %v1673
        %v1675 = vpop.f32.mrb[0].mxu0
        %v1676 = vpop.f32.mrb[0].mxu0
        %v1677 = vadd.f32 %v1532, %v1676
        %v1678 = vpop.f32.mrb[0].mxu0
        %1679 = vmatprep.mubr.bf16.mxu0 0
        %1680 = vmatmul.mubr.bf16.gmra.mrb[0].mxu0 %v1357
        %v1681 = vpop.f32.mrb[0].mxu0
        %v1682 = vadd.f32 %v1537, %v1681
        %v1683 = vpop.f32.mrb[0].mxu0
        %v1684 = vpop.f32.mrb[0].mxu0
        %v1685 = vadd.f32 %v1540, %v1684
        %v1686 = vpop.f32.mrb[0].mxu0
        %1687 = vdwg.mxu0
        %v1688 = vpack.c.bf16 %v1335, %v1334
        %v1689 = vpack.c.bf16 %v1337, %v1336
        %v1690 = vpack.c.bf16 %v1339, %v1338
        %v1691 = vpack.c.bf16 %v1341, %v1340
        %v1692 = vpack.c.bf16 %v1343, %v1342
        %v1693 = vpack.c.bf16 %v1345, %v1344
        %v1694 = vpack.c.bf16 %v1347, %v1346
        %v1695 = vpack.c.bf16 %v1349, %v1348
        %v1696 = vld [vmem:[#allocation7 + $0x80] sm:$0xf]
        %v1697 = vld [vmem:[#allocation7 + $0x84] sm:$0xf]
        %v1698 = vld [vmem:[#allocation7 + $0x88] sm:$0xf]
        %v1699 = vld [vmem:[#allocation7 + $0x8c] sm:$0xf]
        %v1700 = vld [vmem:[#allocation7 + $0x90] sm:$0xf]
        %v1701 = vld [vmem:[#allocation7 + $0x94] sm:$0xf]
        %v1702 = vld [vmem:[#allocation7 + $0x98] sm:$0xf]
        %v1703 = vld [vmem:[#allocation7 + $0x9c] sm:$0xf]
        %v1704 = vld [vmem:[#allocation7 + $0xa0] sm:$0xf]
        %v1705 = vld [vmem:[#allocation7 + $0xa4] sm:$0xf]
        %v1706 = vld [vmem:[#allocation7 + $0xa8] sm:$0xf]
        %v1707 = vld [vmem:[#allocation7 + $0xac] sm:$0xf]
        %v1708 = vld [vmem:[#allocation7 + $0xb0] sm:$0xf]
        %v1709 = vld [vmem:[#allocation7 + $0xb4] sm:$0xf]
        %v1710 = vld [vmem:[#allocation7 + $0xb8] sm:$0xf]
        %v1711 = vld [vmem:[#allocation7 + $0xbc] sm:$0xf]
        %v1728 = vunpack.c.l.b16 %v1696
        %v1729 = vunpack.c.l.b16 %v1697
        %v1730 = vunpack.c.l.b16 %v1698
        %v1731 = vunpack.c.l.b16 %v1699
        %v1732 = vunpack.c.l.b16 %v1700
        %v1733 = vunpack.c.l.b16 %v1701
        %v1734 = vunpack.c.l.b16 %v1702
        %v1735 = vunpack.c.l.b16 %v1703
        %v1736 = vunpack.c.l.b16 %v1704
        %v1737 = vunpack.c.l.b16 %v1705
        %v1738 = vunpack.c.l.b16 %v1706
        %v1739 = vunpack.c.l.b16 %v1707
        %v1740 = vunpack.c.l.b16 %v1708
        %v1741 = vunpack.c.l.b16 %v1709
        %v1742 = vunpack.c.l.b16 %v1710
        %v1743 = vunpack.c.l.b16 %v1711
        %v1744 = vpack.c.b16 %v1729, %v1728
        %v1745 = vpack.c.b16 %v1731, %v1730
        %v1746 = vpack.c.b16 %v1733, %v1732
        %v1747 = vpack.c.b16 %v1735, %v1734
        %v1748 = vpack.c.b16 %v1737, %v1736
        %v1749 = vpack.c.b16 %v1739, %v1738
        %v1750 = vpack.c.b16 %v1741, %v1740
        %v1751 = vpack.c.b16 %v1743, %v1742
        %1760 = vmatprep.subr.bf16.mxu0 0
        %1761 = vmatpush1.bf16.msra.mxu0 %v1744
        %1762 = vmatprep.subr.bf16.mxu0 0
        %1763 = vmatpush1.bf16.msra.mxu0 %v1745
        %1764 = vmatprep.subr.bf16.mxu0 0
        %1765 = vmatpush1.bf16.msra.mxu0 %v1746
        %1766 = vmatprep.subr.bf16.mxu0 0
        %1767 = vmatpush1.bf16.msra.mxu0 %v1747
        %1768 = vmatprep.subr.bf16.mxu0 0
        %1769 = vmatpush1.bf16.msra.mxu0 %v1748
        %1770 = vmatprep.subr.bf16.mxu0 0
        %1771 = vmatpush1.bf16.msra.mxu0 %v1749
        %1772 = vmatprep.subr.bf16.mxu0 0
        %1773 = vmatpush1.bf16.msra.mxu0 %v1750
        %1774 = vmatprep.subr.bf16.mxu0 0
        %1775 = vmatpush1.bf16.msra.mxu0 %v1751
        %1776 = vmatprep.subr.bf16.mxu0 0
        %1777 = vmatpush1.bf16.msra.mxu0 0
        %1778 = vmatprep.subr.bf16.mxu0 0
        %1779 = vmatpush1.bf16.msra.mxu0 0
        %1780 = vmatprep.subr.bf16.mxu0 0
        %1781 = vmatpush1.bf16.msra.mxu0 0
        %1782 = vmatprep.subr.bf16.mxu0 0
        %1783 = vmatpush1.bf16.msra.mxu0 0
        %1784 = vmatprep.subr.bf16.mxu0 0
        %1785 = vmatpush1.bf16.msra.mxu0 0
        %1786 = vmatprep.subr.bf16.mxu0 0
        %1787 = vmatpush1.bf16.msra.mxu0 0
        %1788 = vmatprep.subr.bf16.mxu0 0
        %1789 = vmatpush1.bf16.msra.mxu0 0
        %1790 = vmatprep.subr.bf16.mxu0 0
        %1791 = vmatpush1.bf16.msra.mxu0 0
        %1792 = vmatprep.mubr.bf16.mxu0 0
        %1793 = vmatmul.mubr.bf16.gmra.mrb[0].mxu0 %v1688
        %v1794 = vpop.f32.mrb[0].mxu0
        %v1795 = vadd.f32 0.0, %v1794
        %v1796 = vpop.f32.mrb[0].mxu0
        %v1797 = vpop.f32.mrb[0].mxu0
        %v1798 = vadd.f32 0.0, %v1797
        %v1799 = vpop.f32.mrb[0].mxu0
        %1800 = vmatprep.mubr.bf16.mxu0 0
        %1801 = vmatmul.mubr.bf16.gmra.mrb[0].mxu0 %v1689
        %v1802 = vpop.f32.mrb[0].mxu0
        %v1803 = vadd.f32 0.0, %v1802
        %v1804 = vpop.f32.mrb[0].mxu0
        %v1805 = vpop.f32.mrb[0].mxu0
        %v1806 = vadd.f32 0.0, %v1805
        %v1807 = vpop.f32.mrb[0].mxu0
        %1808 = vmatprep.mubr.bf16.mxu0 0
        %1809 = vmatmul.mubr.bf16.gmra.mrb[0].mxu0 %v1690
        %v1810 = vpop.f32.mrb[0].mxu0
        %v1811 = vadd.f32 0.0, %v1810
        %v1812 = vpop.f32.mrb[0].mxu0
        %v1813 = vpop.f32.mrb[0].mxu0
        %v1814 = vadd.f32 0.0, %v1813
        %v1815 = vpop.f32.mrb[0].mxu0
        %1816 = vmatprep.mubr.bf16.mxu0 0
        %1817 = vmatmul.mubr.bf16.gmra.mrb[0].mxu0 %v1691
        %v1818 = vpop.f32.mrb[0].mxu0
        %v1819 = vadd.f32 0.0, %v1818
        %v1820 = vpop.f32.mrb[0].mxu0
        %v1821 = vpop.f32.mrb[0].mxu0
        %v1822 = vadd.f32 0.0, %v1821
        %v1823 = vpop.f32.mrb[0].mxu0
        %1824 = vmatprep.mubr.bf16.mxu0 0
        %1825 = vmatmul.mubr.bf16.gmra.mrb[0].mxu0 %v1692
        %v1826 = vpop.f32.mrb[0].mxu0
        %v1827 = vadd.f32 0.0, %v1826
        %v1828 = vpop.f32.mrb[0].mxu0
        %v1829 = vpop.f32.mrb[0].mxu0
        %v1830 = vadd.f32 0.0, %v1829
        %v1831 = vpop.f32.mrb[0].mxu0
        %1832 = vmatprep.mubr.bf16.mxu0 0
        %1833 = vmatmul.mubr.bf16.gmra.mrb[0].mxu0 %v1693
        %v1834 = vpop.f32.mrb[0].mxu0
        %v1835 = vadd.f32 0.0, %v1834
        %v1836 = vpop.f32.mrb[0].mxu0
        %v1837 = vpop.f32.mrb[0].mxu0
        %v1838 = vadd.f32 0.0, %v1837
        %v1839 = vpop.f32.mrb[0].mxu0
        %1840 = vmatprep.mubr.bf16.mxu0 0
        %1841 = vmatmul.mubr.bf16.gmra.mrb[0].mxu0 %v1694
        %v1842 = vpop.f32.mrb[0].mxu0
        %v1843 = vadd.f32 0.0, %v1842
        %v1844 = vpop.f32.mrb[0].mxu0
        %v1845 = vpop.f32.mrb[0].mxu0
        %v1846 = vadd.f32 0.0, %v1845
        %v1847 = vpop.f32.mrb[0].mxu0
        %1848 = vmatprep.mubr.bf16.mxu0 0
        %1849 = vmatmul.mubr.bf16.gmra.mrb[0].mxu0 %v1695
        %v1850 = vpop.f32.mrb[0].mxu0
        %v1851 = vadd.f32 0.0, %v1850
        %v1852 = vpop.f32.mrb[0].mxu0
        %v1853 = vpop.f32.mrb[0].mxu0
        %v1854 = vadd.f32 0.0, %v1853
        %v1855 = vpop.f32.mrb[0].mxu0
        %1856 = vdwg.mxu0
        %v1857 = vadd.f32 %v1626, %v1795
        %v1858 = vadd.f32 %v1629, %v1798
        %v1859 = vadd.f32 %v1634, %v1803
        %v1860 = vadd.f32 %v1637, %v1806
        %v1861 = vadd.f32 %v1642, %v1811
        %v1862 = vadd.f32 %v1645, %v1814
        %v1863 = vadd.f32 %v1650, %v1819
        %v1864 = vadd.f32 %v1653, %v1822
        %v1865 = vadd.f32 %v1658, %v1827
        %v1866 = vadd.f32 %v1661, %v1830
        %v1867 = vadd.f32 %v1666, %v1835
        %v1868 = vadd.f32 %v1669, %v1838
        %v1869 = vadd.f32 %v1674, %v1843
        %v1870 = vadd.f32 %v1677, %v1846
        %v1871 = vadd.f32 %v1682, %v1851
        %v1872 = vadd.f32 %v1685, %v1854
        %v1873 = vadd.f32 %v273, %v1857
        %v1874 = vadd.f32 %v274, %v1858
        %v1875 = vadd.f32 %v275, %v1859
        %v1876 = vadd.f32 %v276, %v1860
        %v1877 = vadd.f32 %v277, %v1861
        %v1878 = vadd.f32 %v278, %v1862
        %v1879 = vadd.f32 %v279, %v1863
        %v1880 = vadd.f32 %v280, %v1864
        %v1881 = vadd.f32 %v281, %v1865
        %v1882 = vadd.f32 %v282, %v1866
        %v1883 = vadd.f32 %v283, %v1867
        %v1884 = vadd.f32 %v284, %v1868
        %v1885 = vadd.f32 %v285, %v1869
        %v1886 = vadd.f32 %v286, %v1870
        %v1887 = vadd.f32 %v287, %v1871
        %v1888 = vadd.f32 %v288, %v1872
        %v1889 = vld [vmem:[%s4] sm:$0x1]
        %v1891 = vlaneseq
        %v1892 = vshrl.u32 %v1891, 7
        %v1893 = vsub.s32 0, %v1892
        %v1894 = vrot.slane %v1889, %v1893
        %v1896 = vadd.f32 %v1873, %v1894
        %v1897 = vadd.f32 %v1874, %v1894
        %v1898 = vadd.f32 %v1875, %v1894
        %v1899 = vadd.f32 %v1876, %v1894
        %v1900 = vadd.f32 %v1877, %v1894
        %v1901 = vadd.f32 %v1878, %v1894
        %v1902 = vadd.f32 %v1879, %v1894
        %v1903 = vadd.f32 %v1880, %v1894
        %v1904 = vadd.f32 %v1881, %v1894
        %v1905 = vadd.f32 %v1882, %v1894
        %v1906 = vadd.f32 %v1883, %v1894
        %v1907 = vadd.f32 %v1884, %v1894
        %v1908 = vadd.f32 %v1885, %v1894
        %v1909 = vadd.f32 %v1886, %v1894
        %v1910 = vadd.f32 %v1887, %v1894
        %v1911 = vadd.f32 %v1888, %v1894
        %v1912 = vmax.f32 %v1896, 0.0
        %v1913 = vmax.f32 %v1897, 0.0
        %v1914 = vmax.f32 %v1898, 0.0
        %v1915 = vmax.f32 %v1899, 0.0
        %v1916 = vmax.f32 %v1900, 0.0
        %v1917 = vmax.f32 %v1901, 0.0
        %v1918 = vmax.f32 %v1902, 0.0
        %v1919 = vmax.f32 %v1903, 0.0
        %v1920 = vmax.f32 %v1904, 0.0
        %v1921 = vmax.f32 %v1905, 0.0
        %v1922 = vmax.f32 %v1906, 0.0
        %v1923 = vmax.f32 %v1907, 0.0
        %v1924 = vmax.f32 %v1908, 0.0
        %v1925 = vmax.f32 %v1909, 0.0
        %v1926 = vmax.f32 %v1910, 0.0
        %v1927 = vmax.f32 %v1911, 0.0
        %1928 = vst [vmem:[%s271] sm:$0xff] %v1912
        %1929 = vst [vmem:[%s271 + $0x8] sm:$0xff] %v1913
        %1930 = vst [vmem:[%s271 + $0x10] sm:$0xff] %v1914
        %1931 = vst [vmem:[%s271 + $0x18] sm:$0xff] %v1915
        %1932 = vst [vmem:[%s271 + $0x20] sm:$0xff] %v1916
        %1933 = vst [vmem:[%s271 + $0x28] sm:$0xff] %v1917
        %1934 = vst [vmem:[%s271 + $0x30] sm:$0xff] %v1918
        %1935 = vst [vmem:[%s271 + $0x38] sm:$0xff] %v1919
        %1936 = vst [vmem:[%s271 + $0x40] sm:$0xff] %v1920
        %1937 = vst [vmem:[%s271 + $0x48] sm:$0xff] %v1921
        %1938 = vst [vmem:[%s271 + $0x50] sm:$0xff] %v1922
        %1939 = vst [vmem:[%s271 + $0x58] sm:$0xff] %v1923
        %1940 = vst [vmem:[%s271 + $0x60] sm:$0xff] %v1924
        %1941 = vst [vmem:[%s271 + $0x68] sm:$0xff] %v1925
        %1942 = vst [vmem:[%s271 + $0x70] sm:$0xff] %v1926
        %1943 = vst [vmem:[%s271 + $0x78] sm:$0xff] %v1927
        %s1944 = sand.u32 %s141, 1
        %s1945 = scalar_lea.sflag [#allocation4], %s1944
        %s1946 = sand.u32 %s141, 1
        %s1947 = smul.addr %s1946, 128
        %s1948 = scalar_lea.vmem [#allocation8], %s1947
        // Predicated region
        $region53: #{tpu_custom_call.1} parent=39 // pred_check
          %p1949 = pneg %p151
        $region54: #{tpu_custom_call.1} parent=39 // pred_check_branch
          %1951 = sbr.rel (%p1949) target = $region56
        $region55: #{tpu_custom_call.1} parent=39 // pred_region
          %s1953 = ssub.s32 2048, 2048
          %1954 = vsyncadd %s1945, %s1953
          %s1955 = smul.addr %s23, 16
          %s1956 = smul.addr %s1955, 128
          %s1957 = scalar_lea.hbm %s5, %s1956
          %s1958 = sshll.u32 %s1948, 4
          %s1959 = int_to_ptr.vmem [resolvable:$true] %s1958
          %1964 = dma.vmem_to_hbm [thread:$0]  %s1959, 2048, %s1957, %s1945, 128, 128, 8
        $region56: #{tpu_custom_call.1} parent=39 // pred_fallthru
          _
      $region40: #{tpu_custom_call.1} parent=5 // pred_fallthru
        _
      %p1965 = scmp.le.s32.totalorder 2, %s18
      // Predicated region
      $region57: #{tpu_custom_call.1} parent=5 // pred_check
        %p1966 = pneg %p1965
      $region58: #{tpu_custom_call.1} parent=5 // pred_check_branch
        %1968 = sbr.rel (%p1966) target = $region60
      $region59: #{tpu_custom_call.1} parent=5 // pred_region
        %s1969 = ssub.s32 %s18, 2
        // Predicated region
        $region61: #{tpu_custom_call.1} parent=59 // pred_check
          %p1970 = pneg %p157
        $region62: #{tpu_custom_call.1} parent=59 // pred_check_branch
          %1972 = sbr.rel (%p1970) target = $region64
        $region63: #{tpu_custom_call.1} parent=59 // pred_region
          %s1973 = sand.u32 %s142, 1
          %s1974 = scalar_lea.sflag [#allocation4], %s1973
          %s1975 = sand.u32 %s142, 1
          %s1976 = smul.addr %s1975, 128
          %s1977 = scalar_lea.vmem [#allocation8], %s1976
          %1978 = dma.done %s1974, 2048
        $region64: #{tpu_custom_call.1} parent=59 // pred_fallthru
          _
      $region60: #{tpu_custom_call.1} parent=5 // pred_fallthru
        _
    $region6: #{tpu_custom_call.1} parent=1 // loop_footer
      %s22 = sadd.s32 1, %s18
    $region7: #{tpu_custom_call.1} parent=1 // loop_footer_branch
      %17 = sbr.rel target = $region3
    $region8: #{tpu_custom_call.1} parent=1 // loop_exit
      _
    %1979 = vsyncpa [#allocation3], 1
    %s1980 = scalar_lea.sflag [#allocation3], 1
    %1981 = vsyncpa %s1980, 1
    %1982 = vsyncpa [#allocation6], 1
    %1983 = vsyncpa [#allocation4], 1
    %s1984 = scalar_lea.sflag [#allocation4], 1
    %1985 = vsyncpa %s1984, 1

</llo_original>
